<compile_context>
chip_gen: v7x
topology: tpu7x:2x2x1
jax: 0.10.0
libtpu: 0.0.40
codegen_flags: <defaults>
</compile_context>

<pallas_src>
import functools
import inspect
import math

import numpy as np
import jax
import jax.numpy as jnp
from jax.experimental import pallas as pl
from jax.experimental.pallas import tpu as pltpu


# ----------------------------------------------------------------------------- utilities

def _cdiv(a, b):
    return -(-a // b)


def _round_up(a, b):
    return _cdiv(a, b) * b


def _sublane_multiple(itemsize):
    # native sublane packing: 8 rows for 32-bit, 16 for 16-bit, 32 for 8-bit dtypes
    return {4: 8, 2: 16, 1: 32}.get(int(itemsize), 8)


def _nearest_src_idx(out_size: int, in_size: int) -> np.ndarray:
    # PyTorch 'nearest' rule: src = floor(dst * in / out)
    return (np.arange(out_size, dtype=np.int64) * in_size) // out_size


def _output_size(in_hw, size, scale_factor):
    H, W = in_hw
    if size is not None:
        if isinstance(size, (tuple, list)):
            return int(size[0]), int(size[1])
        return int(size), int(size)
    if scale_factor is not None:
        if isinstance(scale_factor, (tuple, list)):
            sh, sw = scale_factor
        else:
            sh = sw = scale_factor
        # PyTorch: output = floor(input * scale_factor)
        return int(math.floor(H * float(sh))), int(math.floor(W * float(sw)))
    raise ValueError("either size or scale_factor must be given")


def _vmem_budget():
    """Generation-aware VMEM sizing (v5e/v6e: 128 MiB, v7x: 64 MiB per TensorCore)."""
    cap = None
    try:
        cap = getattr(pltpu.get_tpu_info(), "vmem_capacity_bytes", None)
    except Exception:
        cap = None
    if not cap or cap <= 0:
        cap = 64 * 1024 * 1024  # conservative fallback (v7x per-core VMEM)
    budget = int(cap * 0.60)    # tile-sizing budget (headroom for Mosaic internal scratch)
    limit = int(cap * 0.75)     # scoped-VMEM limit handed to the compiler
    return budget, limit


try:
    _HAS_PIPELINE_MODE = (
        hasattr(pl, "Buffered")
        and "pipeline_mode" in inspect.signature(pl.BlockSpec).parameters
    )
except (ValueError, TypeError):
    _HAS_PIPELINE_MODE = False


def _make_p_spec(shape, index_map, single_buffer):
    if single_buffer and _HAS_PIPELINE_MODE:
        # constant block index -> no need to double-buffer the gather matrix
        return pl.BlockSpec(shape, index_map, pipeline_mode=pl.Buffered(1))
    return pl.BlockSpec(shape, index_map)


# ----------------------------------------------------------------------------- kernel

def _gather_matmul_kernel(x_ref, p_ref, o_ref, *, acc_dtype, precision):
    # x_ref: (m_tile, K)  input slab (rows = flattened batch*channel[*rows])
    # p_ref: (K, tn)      one-hot gather matrix slice (values are exactly 0/1)
    # o_ref: (m_tile, tn) lane-dense output slab
    x = x_ref[...]
    if x.dtype != acc_dtype:
        x = x.astype(acc_dtype)  # integer inputs: cast in-kernel (VPU filler, no HBM copy)
    y = jax.lax.dot(x, p_ref[...], precision=precision,
                    preferred_element_type=acc_dtype)
    o_ref[...] = y.astype(o_ref.dtype)  # no-op when acc_dtype == output dtype


# ----------------------------------------------------------------------------- tiling

def _pick_n_tile(n):
    if n <= 2048:
        return n  # full-width lane-dense block (block == full dim is always legal)
    for tn in (2048, 1024, 512, 256, 128):
        if n % tn == 0:
            return tn
    return 2048   # ragged last block: Pallas masks the out-of-range columns


def _pick_m_tile(m, k, tn, in_isz, p_isz, out_isz, acc_isz, budget, p_single_buffered):
    sub = max(_sublane_multiple(in_isz), _sublane_multiple(out_isz))
    # double-buffered input + output blocks, plus the matmul accumulator slab
    per_row = 2 * k * in_isz + 2 * tn * out_isz + tn * acc_isz
    p_bytes = (1 if p_single_buffered else 2) * k * tn * p_isz
    avail = max(budget - p_bytes, per_row * sub)
    vmem_rows = max(sub, (avail // per_row) // sub * sub)
    # cap so the M axis alone gives ~4 grid steps when M is big enough
    # (per-step overhead amortization + work to shard across TensorCores)
    steps_rows = max(sub, _round_up(_cdiv(m, 4), sub))
    return int(min(m, vmem_rows, steps_rows))


def _onehot_matmul(x2d, p, out_dtype, acc_dtype, precision):
    """out (M, N) = x2d (M, K) @ p (K, N), with p an exact 0/1 selection matrix."""
    M, K = x2d.shape
    Kp, N = p.shape
    assert K == Kp
    acc_dtype = jnp.dtype(acc_dtype)
    in_isz = jnp.dtype(x2d.dtype).itemsize
    p_isz = jnp.dtype(p.dtype).itemsize
    out_isz = jnp.dtype(out_dtype).itemsize
    acc_isz = acc_dtype.itemsize

    budget, vmem_limit = _vmem_budget()

    tn = _pick_n_tile(N)
    grid_n = _cdiv(N, tn)
    m_tile = _pick_m_tile(M, K, tn, in_isz, p_isz, out_isz, acc_isz, budget,
                          p_single_buffered=(grid_n == 1))
    grid_m = _cdiv(M, m_tile)

    # Never let the grid collapse to a single step when there is enough output width:
    # a >= 2-step grid lets v7x shard across its two TensorCores and lets the pipeliner
    # overlap input DMA / MXU / writeback on every generation.
    if grid_m * grid_n == 1 and N >= 256:
        tn = _round_up(_cdiv(N, 2), 128)
        grid_n = _cdiv(N, tn)

    p_single = (grid_n == 1)
    kernel = functools.partial(_gather_matmul_kernel,
                               acc_dtype=acc_dtype, precision=precision)

    return pl.pallas_call(
        kernel,
        out_shape=jax.ShapeDtypeStruct((M, N), out_dtype),
        grid_spec=pltpu.PrefetchScalarGridSpec(
            num_scalar_prefetch=0,
            grid=(grid_m, grid_n),
            in_specs=[
                pl.BlockSpec((m_tile, K), lambda i, j: (i, 0)),
                _make_p_spec((K, tn), lambda i, j: (0, j), single_buffer=p_single),
            ],
            out_specs=pl.BlockSpec((m_tile, tn), lambda i, j: (i, j)),
        ),
        compiler_params=pltpu.CompilerParams(
            dimension_semantics=("parallel", "parallel"),
            vmem_limit_bytes=vmem_limit,
        ),
    )(x2d, p)


# ----------------------------------------------------------------------------- op

def interpolate_nearest(x, size=None, scale_factor=None, _force_path=None):
    """Pallas equivalent of F.interpolate(x, size, scale_factor, mode='nearest'), NCHW."""
    N, C, H, W = x.shape
    H_out, W_out = _output_size((H, W), size, scale_factor)
    NC = N * C

    in_dtype = x.dtype
    if jnp.issubdtype(in_dtype, jnp.floating):
        acc_dtype = in_dtype  # bf16 stays bf16: one-hot gather is exact, halves VMEM/vst
        precision = jax.lax.Precision.HIGHEST if in_dtype == jnp.float32 else None
    else:
        # TODO(synk): int inputs with |v| >= 2^24 lose exactness on the float MXU path.
        acc_dtype = jnp.float32
        precision = jax.lax.Precision.HIGHEST

    p_isz = jnp.dtype(acc_dtype).itemsize
    src_h = _nearest_src_idx(H_out, H)   # static, trace-time
    src_w = _nearest_src_idx(W_out, W)   # static, trace-time

    fused_p_bytes = (H * W) * (H_out * W_out) * p_isz
    use_fused = (H * W <= 1024) and (fused_p_bytes <= 8 * 1024 * 1024)
    if _force_path == "fused":
        use_fused = True
    elif _force_path == "factored":
        use_fused = False

    if use_fused:
        # Fused H+W gather as a single lane-dense one-hot matmul (small spatial sizes only).
        src_flat = (src_h[:, None] * W + src_w[None, :]).reshape(-1)       # (Hout*Wout,)
        p_np = np.arange(H * W, dtype=np.int64)[:, None] == src_flat[None, :]
        p = jnp.asarray(p_np, dtype=acc_dtype)                             # (H*W, Hout*Wout)
        x2 = x.reshape(NC, H * W)                                          # free reshape
        out2 = _onehot_matmul(x2, p, in_dtype, acc_dtype, precision)       # (NC, Hout*Wout)
        return out2.reshape(N, C, H_out, W_out)

    # Factored path: H-gather on the (smaller) input side with static indices, then the
    # Pallas kernel performs only the W-gather (contraction length W, P is (W, Wout)).
    # TODO(synk): move this H-gather into the pallas_call via a scalar-prefetched
    #             index_map so the intermediate (NC, Hout, W) never round-trips HBM.
    p_np = np.arange(W, dtype=np.int64)[:, None] == src_w[None, :]
    p_w = jnp.asarray(p_np, dtype=acc_dtype)                               # (W, Wout)
    xg = jnp.take(x.reshape(NC, H, W), jnp.asarray(src_h), axis=1)         # (NC, Hout, W)
    x2 = xg.reshape(NC * H_out, W)
    out2 = _onehot_matmul(x2, p_w, in_dtype, acc_dtype, precision)         # (NC*Hout, Wout)
    return out2.reshape(N, C, H_out, W_out)


class Interpolate:
    """Mirror of the PyTorch module: stores interpolation config, applies it in forward."""

    def __init__(self, size=None, scale_factor=None, mode="nearest", align_corners=False):
        self.size = size
        self.scale_factor = scale_factor
        self.mode = mode
        self.align_corners = align_corners  # unused for 'nearest' (matches PyTorch)

    def __call__(self, x):
        if self.mode != "nearest":
            # TODO(synk): only mode='nearest' has a Pallas kernel here.
            raise NotImplementedError("only mode='nearest' is implemented")
        return interpolate_nearest(x, size=self.size, scale_factor=self.scale_factor)


# ----------------------------------------------------------------------------- test

if __name__ == "__main__":
    key = jax.random.PRNGKey(0)
    x = jax.random.normal(key, (2, 4, 16, 16), dtype=jnp.float32)

    def ref_nearest(inp, h_out, w_out):
        sh = jnp.asarray(_nearest_src_idx(h_out, inp.shape[2]))
        sw = jnp.asarray(_nearest_src_idx(w_out, inp.shape[3]))
        return inp[:, :, sh, :][:, :, :, sw]

    # 1) integer scale factor (typical decoder upsample) -> fused one-hot-matmul path
    mod = Interpolate(scale_factor=2, mode="nearest")
    y = jax.block_until_ready(mod(x))
    assert y.shape == (2, 4, 32, 32), y.shape
    assert jnp.array_equal(y, ref_nearest(x, 32, 32)), "mismatch (scale_factor=2)"

    # 2) explicit non-uniform output size (general index rule, ragged N tiling)
    mod2 = Interpolate(size=(24, 40), mode="nearest")
    y2 = jax.block_until_ready(mod2(x))
    assert y2.shape == (2, 4, 24, 40), y2.shape
    assert jnp.array_equal(y2, ref_nearest(x, 24, 40)), "mismatch (size=(24,40))"

    # 3) factored (large-image) path, forced on the small input so it stays tested
    y3 = jax.block_until_ready(interpolate_nearest(x, scale_factor=2,
                                                   _force_path="factored"))
    assert jnp.array_equal(y3, ref_nearest(x, 32, 32)), "mismatch (factored path)"

    # 4) bf16 stays bf16 end-to-end (one-hot gather is exact in bf16)
    x_bf = x.astype(jnp.bfloat16)
    y4 = jax.block_until_ready(interpolate_nearest(x_bf, scale_factor=2))
    assert y4.dtype == jnp.bfloat16
    assert jnp.array_equal(y4, ref_nearest(x_bf, 32, 32)), "mismatch (bf16)"

    print("KERNEL_OK")
</pallas_src>

<mosaic_0001>
module attributes {stable_mosaic.version = 11 : i64} {
  func.func @_gather_matmul_kernel(%arg0: i32, %arg1: i32, %arg2: memref<8x256xf32, #tpu.memory_space<vmem>>, %arg3: memref<256x512xf32, #tpu.memory_space<vmem>>, %arg4: memref<8x512xf32, #tpu.memory_space<vmem>>) attributes {dimension_semantics = [#tpu.dimension_semantics<parallel>, #tpu.dimension_semantics<parallel>], iteration_bounds = array<i64: 1, 2>, scalar_prefetch = 0 : i64, scratch_operands = 0 : i64, tpu.core_type = #tpu.core_type<tc>, window_params = [{transform_indices = @transform_0, window_bounds = array<i64: 8, 256>}, {transform_indices = @transform_1, window_bounds = array<i64: 256, 512>}, {transform_indices = @transform_2, window_bounds = array<i64: 8, 512>}]} {
    %c0 = arith.constant 0 : index
    %c0_0 = arith.constant 0 : index
    %0 = vector.load %arg2[%c0, %c0_0] : memref<8x256xf32, #tpu.memory_space<vmem>>, vector<8x256xf32>
    %c0_1 = arith.constant 0 : index
    %c0_2 = arith.constant 0 : index
    %1 = vector.load %arg3[%c0_1, %c0_2] : memref<256x512xf32, #tpu.memory_space<vmem>>, vector<256x512xf32>
    %cst = arith.constant dense<0.000000e+00> : vector<8x512xf32>
    %2 = tpu.matmul %0, %1, %cst {dimension_numbers = #tpu.dot_dimension_numbers<[1], [0], [0], [1], [0, 0, 1, 1], [], []>, precision = #tpu.contract_precision<fp32>} : vector<8x256xf32>, vector<256x512xf32>, vector<8x512xf32> -> vector<8x512xf32>
    %c0_3 = arith.constant 0 : index
    %c0_4 = arith.constant 0 : index
    %3 = vector.load %arg4[%c0_3, %c0_4] : memref<8x512xf32, #tpu.memory_space<vmem>>, vector<8x512xf32>
    tpu.vector_store %arg4[%c0_3, %c0_4], %2 {strides = array<i32>} : memref<8x512xf32, #tpu.memory_space<vmem>>, vector<8x512xf32>,
    return
  }
  func.func @transform_0(%arg0: i32, %arg1: i32) -> (i32, i32) {
    %c0_i32 = arith.constant 0 : i32
    %c0_i32_0 = arith.constant 0 : i32
    return %arg0, %c0_i32 : i32, i32
  }
  func.func @transform_1(%arg0: i32, %arg1: i32) -> (i32, i32) {
    %c0_i32 = arith.constant 0 : i32
    %c0_i32_0 = arith.constant 0 : i32
    return %c0_i32, %arg1 : i32, i32
  }
  func.func @transform_2(%arg0: i32, %arg1: i32) -> (i32, i32) {
    %c0_i32 = arith.constant 0 : i32
    return %arg0, %arg1 : i32, i32
  }
}

</mosaic_0001>

<llo_original>
// kernel: tpu_custom_call.1
$region0: #{tpu_custom_call.1}
  #allocation0 [shape = 'u32[]', space=smem, size = 0x4, offset = 0x4, fixed_abs, tag = 'smem constant byte address 0x4 - core index']
  #allocation1 [shape = 'u32[144,128]{1,0:T(1,128)}', space=vmem, size = 0x12000, scoped, tag = 'internal scratch']
  %s0 = inlined_call_operand.hbm [shape: f32[8,256], index: 0, kind: input, shape index: {}]
  %s1 = inlined_call_operand.hbm [shape: f32[256,1024], index: 1, kind: input, shape index: {}]
  %s2 = inlined_call_operand.hbm [shape: f32[8,1024], index: 2, kind: output, shape index: {}]
  %s3 = sld [smem:[#allocation0]]
  $region49: #{tpu_custom_call.1} parent=0
    _
  %s5 = ssub.s32 1, %s3
  %s6 = scalar_select 0, %s5, %s3
  $region1: #{tpu_custom_call.1} parent=0
    #allocation2 [shape = 'u8[8192]{0}', space=vmem, size = 0x2000, scoped, tag = 'input window, operand 0, single buffered']
    #allocation3 [shape = 's32[2]{0}', space=sflag, size = 0x8, scoped, tag = 'scoped memory for tpu_custom_call.1']
    #allocation4 [shape = 's32[2]{0}', space=sflag, size = 0x8, scoped, tag = 'scoped memory for tpu_custom_call.1']
    #allocation5 [shape = 'u8[1048576]{0}', space=vmem, size = 0x100000, scoped, tag = 'input window, operand 1']
    #allocation6 [shape = 's32[2]{0}', space=sflag, size = 0x8, scoped, tag = 'scoped memory for tpu_custom_call.1']
    #allocation7 [shape = 'u8[32768]{0}', space=vmem, size = 0x8000, scoped, tag = 'output window, operand 0']
    %7 = vsyncpa [#allocation3], 0
    %8 = vsyncpa [#allocation6], 0
    %s9 = scalar_lea.sflag [#allocation6], 1
    %10 = vsyncpa %s9, 0
    %11 = vsyncpa [#allocation4], 0
    %s12 = scalar_lea.sflag [#allocation4], 1
    %13 = vsyncpa %s12, 0
    loop: start=0, step=1, limit=4
    $region2: #{tpu_custom_call.1} parent=1 // loop_pre_header
      _
    $region3: #{tpu_custom_call.1} parent=1 // loop_header
      %s15 = sphi 0, %s19
      %p16 = scmp.ge.s32.totalorder %s15, 4
      %s22 = sphi 0, %s34
      %s23 = sphi 0, %s30
      %s24 = sphi 0, %s22
      %s25 = sphi 0, %s23
      %s26 = sphi 0, %s24
      %s27 = sphi 0, %s25
      %s37 = sphi 0, %s39
      %s40 = sphi 0, %s37
      %s41 = sphi 0, %s40
      %s57 = sphi 0, %s41
      %s63 = sphi 0, %s65
      %s66 = sphi 0, %s63
      %s67 = sphi 0, %s66
      %s83 = sphi 0, %s67
      %s91 = sphi 0, %s93
      %s94 = sphi 0, %s91
      %s95 = sphi 0, %s94
      %s111 = sphi 0, %s95
    $region4: #{tpu_custom_call.1} parent=1 // loop_header_branch
      %18 = sbr.rel (%p16) target = $region8
    $region5: #{tpu_custom_call.1} parent=1 // loop_body
      %s20 = ssub.s32 %s15, 1
      %s21 = ssub.s32 %s15, 2
      %s28 = sadd.s32 1, %s23
      %p29 = scmp.ge.s32.totalorder %s28, 2
      %s30 = scalar_select %p29, 0, %s28
      %s31 = sadd.s32 1, %s22
      %s32 = scalar_select %p29, %s31, %s22
      %p33 = scmp.ge.s32.totalorder %s32, 1
      %s34 = scalar_select %p33, 0, %s32
      %s35 = ssub.s32 %s22, %s34
      %p36 = scmp.eq.s32.totalorder %s35, 0
      %s38 = sadd.s32 %s37, 1
      %s39 = scalar_select %p36, %s37, %s38
      %p42 = pneg %p36
      %p43 = scmp.eq.s32.totalorder %s15, 1
      %p44 = por %p42, %p43
      %p45 = scmp.ne.s32.totalorder %s37, %s40
      %p46 = scmp.eq.s32.totalorder %s15, 0
      %p47 = por %p45, %p46
      %p48 = scmp.ne.s32.totalorder %s37, %s40
      %p49 = scmp.eq.s32.totalorder %s20, 1
      %p50 = por %p48, %p49
      %p51 = scmp.ne.s32.totalorder %s40, %s41
      %p52 = scmp.eq.s32.totalorder %s20, 0
      %p53 = por %p51, %p52
      %p54 = scmp.ne.s32.totalorder %s40, %s41
      %p55 = scmp.eq.s32.totalorder %s21, 1
      %p56 = por %p54, %p55
      %p58 = scmp.ne.s32.totalorder %s41, %s57
      %p59 = scmp.eq.s32.totalorder %s21, 0
      %p60 = por %p58, %p59
      %s61 = ssub.s32 %s23, %s30
      %p62 = scmp.eq.s32.totalorder %s61, 0
      %s64 = sadd.s32 %s63, 1
      %s65 = scalar_select %p62, %s63, %s64
      %p68 = pneg %p62
      %p69 = scmp.eq.s32.totalorder %s15, 1
      %p70 = por %p68, %p69
      %p71 = scmp.ne.s32.totalorder %s63, %s66
      %p72 = scmp.eq.s32.totalorder %s15, 0
      %p73 = por %p71, %p72
      %p74 = scmp.ne.s32.totalorder %s63, %s66
      %p75 = scmp.eq.s32.totalorder %s20, 1
      %p76 = por %p74, %p75
      %p77 = scmp.ne.s32.totalorder %s66, %s67
      %p78 = scmp.eq.s32.totalorder %s20, 0
      %p79 = por %p77, %p78
      %p80 = scmp.ne.s32.totalorder %s66, %s67
      %p81 = scmp.eq.s32.totalorder %s21, 1
      %p82 = por %p80, %p81
      %p84 = scmp.ne.s32.totalorder %s67, %s83
      %p85 = scmp.eq.s32.totalorder %s21, 0
      %p86 = por %p84, %p85
      %s87 = ssub.s32 %s22, %s34
      %s88 = ssub.s32 %s23, %s30
      %s89 = sor.u32 %s87, %s88
      %p90 = scmp.eq.s32.totalorder %s89, 0
      %s92 = sadd.s32 %s91, 1
      %s93 = scalar_select %p90, %s91, %s92
      %p96 = pneg %p90
      %p97 = scmp.eq.s32.totalorder %s15, 1
      %p98 = por %p96, %p97
      %p99 = scmp.ne.s32.totalorder %s91, %s94
      %p100 = scmp.eq.s32.totalorder %s15, 0
      %p101 = por %p99, %p100
      %p102 = scmp.ne.s32.totalorder %s91, %s94
      %p103 = scmp.eq.s32.totalorder %s20, 1
      %p104 = por %p102, %p103
      %p105 = scmp.ne.s32.totalorder %s94, %s95
      %p106 = scmp.eq.s32.totalorder %s20, 0
      %p107 = por %p105, %p106
      %p108 = scmp.ne.s32.totalorder %s94, %s95
      %p109 = scmp.eq.s32.totalorder %s21, 1
      %p110 = por %p108, %p109
      %p112 = scmp.ne.s32.totalorder %s95, %s111
      %p113 = scmp.eq.s32.totalorder %s21, 0
      %p114 = por %p112, %p113
      %p115 = scmp.le.s32.totalorder 1, %s15
      %p116 = scmp.lt.s32.totalorder %s15, 3
      %p117 = pnand %p115, %p116
      %p118 = pneg %p117
      // Predicated region
      $region9: #{tpu_custom_call.1} parent=5 // pred_check
        _
      $region10: #{tpu_custom_call.1} parent=5 // pred_check_branch
        %120 = sbr.rel (%p117) target = $region12
      $region11: #{tpu_custom_call.1} parent=5 // pred_region
        %s121 = ssub.s32 %s15, 1
        // Predicated region
        $region13: #{tpu_custom_call.1} parent=11 // pred_check
          %p122 = pneg %p53
        $region14: #{tpu_custom_call.1} parent=11 // pred_check_branch
          %124 = sbr.rel (%p122) target = $region16
        $region15: #{tpu_custom_call.1} parent=11 // pred_region
          %s126 = ssub.s32 256, 256
          %127 = vsyncadd [#allocation3], %s126
          %s128 = smul.addr %s24, 2
          %s129 = smul.addr %s128, 128
          %s130 = scalar_lea.hbm %s0, %s129
          %s132 = sshll.u32 [#allocation2], 4
          %s133 = int_to_ptr.vmem [resolvable:$true] %s132
          %135 = dma.hbm_to_vmem [thread:$0]  %s130, 256, %s133, [#allocation3]
        $region16: #{tpu_custom_call.1} parent=11 // pred_fallthru
          _
      $region12: #{tpu_custom_call.1} parent=5 // pred_fallthru
        _
      %p136 = scmp.lt.s32.totalorder %s15, 2
      // Predicated region
      $region17: #{tpu_custom_call.1} parent=5 // pred_check
        %p137 = pneg %p136
      $region18: #{tpu_custom_call.1} parent=5 // pred_check_branch
        %139 = sbr.rel (%p137) target = $region20
      $region19: #{tpu_custom_call.1} parent=5 // pred_region
        // Predicated region
        $region21: #{tpu_custom_call.1} parent=19 // pred_check
          %p140 = pneg %p73
        $region22: #{tpu_custom_call.1} parent=19 // pred_check_branch
          %142 = sbr.rel (%p140) target = $region24
        $region23: #{tpu_custom_call.1} parent=19 // pred_region
          %s143 = sand.u32 %s63, 1
          %s144 = scalar_lea.sflag [#allocation6], %s143
          %s145 = sand.u32 %s63, 1
          %s146 = smul.addr %s145, 1024
          %s147 = scalar_lea.vmem [#allocation5], %s146
          %s148 = smul.u32 4, %s23
          %s150 = ssub.s32 16384, 16384
          %151 = vsyncadd %s144, %s150
          %s152 = smul.addr %s148, 128
          %s153 = scalar_lea.hbm %s1, %s152
          %s154 = sshll.u32 %s147, 4
          %s155 = int_to_ptr.vmem [resolvable:$true] %s154
          %160 = dma.hbm_to_vmem [thread:$0]  %s153, 16384, %s155, %s144, 1024, 512, 32
        $region24: #{tpu_custom_call.1} parent=19 // pred_fallthru
          _
      $region20: #{tpu_custom_call.1} parent=5 // pred_fallthru
        _
      %p161 = scmp.le.s32.totalorder 1, %s15
      %p162 = scmp.lt.s32.totalorder %s15, 3
      %p163 = pnand %p161, %p162
      %p164 = pneg %p163
      // Predicated region
      $region25: #{tpu_custom_call.1} parent=5 // pred_check
        _
      $region26: #{tpu_custom_call.1} parent=5 // pred_check_branch
        %166 = sbr.rel (%p163) target = $region28
      $region27: #{tpu_custom_call.1} parent=5 // pred_region
        %s167 = ssub.s32 %s15, 1
        // Predicated region
        $region29: #{tpu_custom_call.1} parent=27 // pred_check
          %p168 = pneg %p53
        $region30: #{tpu_custom_call.1} parent=27 // pred_check_branch
          %170 = sbr.rel (%p168) target = $region32
        $region31: #{tpu_custom_call.1} parent=27 // pred_region
          %171 = dma.done [#allocation3], 256
        $region32: #{tpu_custom_call.1} parent=27 // pred_fallthru
          _
        %s172 = sand.u32 %s66, 1
        %s173 = scalar_lea.sflag [#allocation6], %s172
        %s174 = sand.u32 %s66, 1
        %s175 = smul.addr %s174, 1024
        %s176 = scalar_lea.vmem [#allocation5], %s175
        // Predicated region
        $region33: #{tpu_custom_call.1} parent=27 // pred_check
          %p177 = pneg %p79
        $region34: #{tpu_custom_call.1} parent=27 // pred_check_branch
          %179 = sbr.rel (%p177) target = $region36
        $region35: #{tpu_custom_call.1} parent=27 // pred_region
          %180 = dma.done %s173, 16384
        $region36: #{tpu_custom_call.1} parent=27 // pred_fallthru
          _
        %p181 = pneg %p53
        %p182 = pneg %p50
        %s183 = sand.u32 %s66, 1
        %s184 = scalar_lea.sflag [#allocation6], %s183
        %s185 = sand.u32 %s66, 1
        %s186 = smul.addr %s185, 1024
        %s187 = scalar_lea.vmem [#allocation5], %s186
        %p188 = pneg %p79
        %p189 = pneg %p76
        %p190 = pneg %p107
        %p191 = pneg %p104
        %s192 = sand.u32 %s94, 1
        %s193 = scalar_lea.sflag [#allocation4], %s192
        %s194 = sand.u32 %s94, 1
        %s195 = smul.addr %s194, 32
        %s196 = scalar_lea.vmem [#allocation7], %s195
        %s197 = smul.u32 4, %s25
        %s198 = smul.u32 4, %s25
        %v199 = vld [vmem:[#allocation2] sm:$0xff]
        %v200 = vld [vmem:[#allocation2 + $0x8] sm:$0xff]
        %v201 = vld [vmem:[%s176] sm:$0xff]
        %v202 = vld [vmem:[%s176 + $0x8] sm:$0xff]
        %v203 = vld [vmem:[%s176 + $0x10] sm:$0xff]
        %v204 = vld [vmem:[%s176 + $0x18] sm:$0xff]
        %v205 = vld [vmem:[%s176 + $0x20] sm:$0xff]
        %v206 = vld [vmem:[%s176 + $0x28] sm:$0xff]
        %v207 = vld [vmem:[%s176 + $0x30] sm:$0xff]
        %v208 = vld [vmem:[%s176 + $0x38] sm:$0xff]
        %v209 = vld [vmem:[%s176 + $0x40] sm:$0xff]
        %v210 = vld [vmem:[%s176 + $0x48] sm:$0xff]
        %v211 = vld [vmem:[%s176 + $0x50] sm:$0xff]
        %v212 = vld [vmem:[%s176 + $0x58] sm:$0xff]
        %v213 = vld [vmem:[%s176 + $0x60] sm:$0xff]
        %v214 = vld [vmem:[%s176 + $0x68] sm:$0xff]
        %v215 = vld [vmem:[%s176 + $0x70] sm:$0xff]
        %v216 = vld [vmem:[%s176 + $0x78] sm:$0xff]
        %v217 = vld [vmem:[%s176 + $0x80] sm:$0xff]
        %v218 = vld [vmem:[%s176 + $0x88] sm:$0xff]
        %v219 = vld [vmem:[%s176 + $0x90] sm:$0xff]
        %v220 = vld [vmem:[%s176 + $0x98] sm:$0xff]
        %v221 = vld [vmem:[%s176 + $0xa0] sm:$0xff]
        %v222 = vld [vmem:[%s176 + $0xa8] sm:$0xff]
        %v223 = vld [vmem:[%s176 + $0xb0] sm:$0xff]
        %v224 = vld [vmem:[%s176 + $0xb8] sm:$0xff]
        %v225 = vld [vmem:[%s176 + $0xc0] sm:$0xff]
        %v226 = vld [vmem:[%s176 + $0xc8] sm:$0xff]
        %v227 = vld [vmem:[%s176 + $0xd0] sm:$0xff]
        %v228 = vld [vmem:[%s176 + $0xd8] sm:$0xff]
        %v229 = vld [vmem:[%s176 + $0xe0] sm:$0xff]
        %v230 = vld [vmem:[%s176 + $0xe8] sm:$0xff]
        %v231 = vld [vmem:[%s176 + $0xf0] sm:$0xff]
        %v232 = vld [vmem:[%s176 + $0xf8] sm:$0xff]
        %v233 = vld [vmem:[%s176 + $0x100] sm:$0xff]
        %v234 = vld [vmem:[%s176 + $0x108] sm:$0xff]
        %v235 = vld [vmem:[%s176 + $0x110] sm:$0xff]
        %v236 = vld [vmem:[%s176 + $0x118] sm:$0xff]
        %v237 = vld [vmem:[%s176 + $0x120] sm:$0xff]
        %v238 = vld [vmem:[%s176 + $0x128] sm:$0xff]
        %v239 = vld [vmem:[%s176 + $0x130] sm:$0xff]
        %v240 = vld [vmem:[%s176 + $0x138] sm:$0xff]
        %v241 = vld [vmem:[%s176 + $0x140] sm:$0xff]
        %v242 = vld [vmem:[%s176 + $0x148] sm:$0xff]
        %v243 = vld [vmem:[%s176 + $0x150] sm:$0xff]
        %v244 = vld [vmem:[%s176 + $0x158] sm:$0xff]
        %v245 = vld [vmem:[%s176 + $0x160] sm:$0xff]
        %v246 = vld [vmem:[%s176 + $0x168] sm:$0xff]
        %v247 = vld [vmem:[%s176 + $0x170] sm:$0xff]
        %v248 = vld [vmem:[%s176 + $0x178] sm:$0xff]
        %v249 = vld [vmem:[%s176 + $0x180] sm:$0xff]
        %v250 = vld [vmem:[%s176 + $0x188] sm:$0xff]
        %v251 = vld [vmem:[%s176 + $0x190] sm:$0xff]
        %v252 = vld [vmem:[%s176 + $0x198] sm:$0xff]
        %v253 = vld [vmem:[%s176 + $0x1a0] sm:$0xff]
        %v254 = vld [vmem:[%s176 + $0x1a8] sm:$0xff]
        %v255 = vld [vmem:[%s176 + $0x1b0] sm:$0xff]
        %v256 = vld [vmem:[%s176 + $0x1b8] sm:$0xff]
        %v257 = vld [vmem:[%s176 + $0x1c0] sm:$0xff]
        %v258 = vld [vmem:[%s176 + $0x1c8] sm:$0xff]
        %v259 = vld [vmem:[%s176 + $0x1d0] sm:$0xff]
        %v260 = vld [vmem:[%s176 + $0x1d8] sm:$0xff]
        %v261 = vld [vmem:[%s176 + $0x1e0] sm:$0xff]
        %v262 = vld [vmem:[%s176 + $0x1e8] sm:$0xff]
        %v263 = vld [vmem:[%s176 + $0x1f0] sm:$0xff]
        %v264 = vld [vmem:[%s176 + $0x1f8] sm:$0xff]
        %v265 = vld [vmem:[%s176 + $0x200] sm:$0xff]
        %v266 = vld [vmem:[%s176 + $0x208] sm:$0xff]
        %v267 = vld [vmem:[%s176 + $0x210] sm:$0xff]
        %v268 = vld [vmem:[%s176 + $0x218] sm:$0xff]
        %v269 = vld [vmem:[%s176 + $0x220] sm:$0xff]
        %v270 = vld [vmem:[%s176 + $0x228] sm:$0xff]
        %v271 = vld [vmem:[%s176 + $0x230] sm:$0xff]
        %v272 = vld [vmem:[%s176 + $0x238] sm:$0xff]
        %v273 = vld [vmem:[%s176 + $0x240] sm:$0xff]
        %v274 = vld [vmem:[%s176 + $0x248] sm:$0xff]
        %v275 = vld [vmem:[%s176 + $0x250] sm:$0xff]
        %v276 = vld [vmem:[%s176 + $0x258] sm:$0xff]
        %v277 = vld [vmem:[%s176 + $0x260] sm:$0xff]
        %v278 = vld [vmem:[%s176 + $0x268] sm:$0xff]
        %v279 = vld [vmem:[%s176 + $0x270] sm:$0xff]
        %v280 = vld [vmem:[%s176 + $0x278] sm:$0xff]
        %v281 = vld [vmem:[%s176 + $0x280] sm:$0xff]
        %v282 = vld [vmem:[%s176 + $0x288] sm:$0xff]
        %v283 = vld [vmem:[%s176 + $0x290] sm:$0xff]
        %v284 = vld [vmem:[%s176 + $0x298] sm:$0xff]
        %v285 = vld [vmem:[%s176 + $0x2a0] sm:$0xff]
        %v286 = vld [vmem:[%s176 + $0x2a8] sm:$0xff]
        %v287 = vld [vmem:[%s176 + $0x2b0] sm:$0xff]
        %v288 = vld [vmem:[%s176 + $0x2b8] sm:$0xff]
        %v289 = vld [vmem:[%s176 + $0x2c0] sm:$0xff]
        %v290 = vld [vmem:[%s176 + $0x2c8] sm:$0xff]
        %v291 = vld [vmem:[%s176 + $0x2d0] sm:$0xff]
        %v292 = vld [vmem:[%s176 + $0x2d8] sm:$0xff]
        %v293 = vld [vmem:[%s176 + $0x2e0] sm:$0xff]
        %v294 = vld [vmem:[%s176 + $0x2e8] sm:$0xff]
        %v295 = vld [vmem:[%s176 + $0x2f0] sm:$0xff]
        %v296 = vld [vmem:[%s176 + $0x2f8] sm:$0xff]
        %v297 = vld [vmem:[%s176 + $0x300] sm:$0xff]
        %v298 = vld [vmem:[%s176 + $0x308] sm:$0xff]
        %v299 = vld [vmem:[%s176 + $0x310] sm:$0xff]
        %v300 = vld [vmem:[%s176 + $0x318] sm:$0xff]
        %v301 = vld [vmem:[%s176 + $0x320] sm:$0xff]
        %v302 = vld [vmem:[%s176 + $0x328] sm:$0xff]
        %v303 = vld [vmem:[%s176 + $0x330] sm:$0xff]
        %v304 = vld [vmem:[%s176 + $0x338] sm:$0xff]
        %v305 = vld [vmem:[%s176 + $0x340] sm:$0xff]
        %v306 = vld [vmem:[%s176 + $0x348] sm:$0xff]
        %v307 = vld [vmem:[%s176 + $0x350] sm:$0xff]
        %v308 = vld [vmem:[%s176 + $0x358] sm:$0xff]
        %v309 = vld [vmem:[%s176 + $0x360] sm:$0xff]
        %v310 = vld [vmem:[%s176 + $0x368] sm:$0xff]
        %v311 = vld [vmem:[%s176 + $0x370] sm:$0xff]
        %v312 = vld [vmem:[%s176 + $0x378] sm:$0xff]
        %v313 = vld [vmem:[%s176 + $0x380] sm:$0xff]
        %v314 = vld [vmem:[%s176 + $0x388] sm:$0xff]
        %v315 = vld [vmem:[%s176 + $0x390] sm:$0xff]
        %v316 = vld [vmem:[%s176 + $0x398] sm:$0xff]
        %v317 = vld [vmem:[%s176 + $0x3a0] sm:$0xff]
        %v318 = vld [vmem:[%s176 + $0x3a8] sm:$0xff]
        %v319 = vld [vmem:[%s176 + $0x3b0] sm:$0xff]
        %v320 = vld [vmem:[%s176 + $0x3b8] sm:$0xff]
        %v321 = vld [vmem:[%s176 + $0x3c0] sm:$0xff]
        %v322 = vld [vmem:[%s176 + $0x3c8] sm:$0xff]
        %v323 = vld [vmem:[%s176 + $0x3d0] sm:$0xff]
        %v324 = vld [vmem:[%s176 + $0x3d8] sm:$0xff]
        %v325 = vld [vmem:[%s176 + $0x3e0] sm:$0xff]
        %v326 = vld [vmem:[%s176 + $0x3e8] sm:$0xff]
        %v327 = vld [vmem:[%s176 + $0x3f0] sm:$0xff]
        %v328 = vld [vmem:[%s176 + $0x3f8] sm:$0xff]
        %v329 = vand.u32 %v202, 4294901760
        %330 = vmatprep.subr.mxu0 %v329
        %v331 = vand.u32 %v201, 4294901760
        %332 = vmatpush1.msra.mxu0 %v331
        %v333 = vand.u32 %v206, 4294901760
        %334 = vmatprep.subr.mxu0 %v333
        %v335 = vand.u32 %v205, 4294901760
        %336 = vmatpush1.msra.mxu0 %v335
        %v337 = vand.u32 %v210, 4294901760
        %338 = vmatprep.subr.mxu0 %v337
        %v339 = vand.u32 %v209, 4294901760
        %340 = vmatpush1.msra.mxu0 %v339
        %v341 = vand.u32 %v214, 4294901760
        %342 = vmatprep.subr.mxu0 %v341
        %v343 = vand.u32 %v213, 4294901760
        %344 = vmatpush1.msra.mxu0 %v343
        %v345 = vand.u32 %v218, 4294901760
        %346 = vmatprep.subr.mxu0 %v345
        %v347 = vand.u32 %v217, 4294901760
        %348 = vmatpush1.msra.mxu0 %v347
        %v349 = vand.u32 %v222, 4294901760
        %350 = vmatprep.subr.mxu0 %v349
        %v351 = vand.u32 %v221, 4294901760
        %352 = vmatpush1.msra.mxu0 %v351
        %v353 = vand.u32 %v226, 4294901760
        %354 = vmatprep.subr.mxu0 %v353
        %v355 = vand.u32 %v225, 4294901760
        %356 = vmatpush1.msra.mxu0 %v355
        %v357 = vand.u32 %v230, 4294901760
        %358 = vmatprep.subr.mxu0 %v357
        %v359 = vand.u32 %v229, 4294901760
        %360 = vmatpush1.msra.mxu0 %v359
        %v361 = vand.u32 %v234, 4294901760
        %362 = vmatprep.subr.mxu0 %v361
        %v363 = vand.u32 %v233, 4294901760
        %364 = vmatpush1.msra.mxu0 %v363
        %v365 = vand.u32 %v238, 4294901760
        %366 = vmatprep.subr.mxu0 %v365
        %v367 = vand.u32 %v237, 4294901760
        %368 = vmatpush1.msra.mxu0 %v367
        %v369 = vand.u32 %v242, 4294901760
        %370 = vmatprep.subr.mxu0 %v369
        %v371 = vand.u32 %v241, 4294901760
        %372 = vmatpush1.msra.mxu0 %v371
        %v373 = vand.u32 %v246, 4294901760
        %374 = vmatprep.subr.mxu0 %v373
        %v375 = vand.u32 %v245, 4294901760
        %376 = vmatpush1.msra.mxu0 %v375
        %v377 = vand.u32 %v250, 4294901760
        %378 = vmatprep.subr.mxu0 %v377
        %v379 = vand.u32 %v249, 4294901760
        %380 = vmatpush1.msra.mxu0 %v379
        %v381 = vand.u32 %v254, 4294901760
        %382 = vmatprep.subr.mxu0 %v381
        %v383 = vand.u32 %v253, 4294901760
        %384 = vmatpush1.msra.mxu0 %v383
        %v385 = vand.u32 %v258, 4294901760
        %386 = vmatprep.subr.mxu0 %v385
        %v387 = vand.u32 %v257, 4294901760
        %388 = vmatpush1.msra.mxu0 %v387
        %v389 = vand.u32 %v262, 4294901760
        %390 = vmatprep.subr.mxu0 %v389
        %v391 = vand.u32 %v261, 4294901760
        %392 = vmatpush1.msra.mxu0 %v391
        %v393 = vand.u32 %v266, 4294901760
        %394 = vmatprep.subr.mxu0 %v393
        %v395 = vand.u32 %v265, 4294901760
        %396 = vmatpush1.msra.mxu0 %v395
        %v397 = vand.u32 %v270, 4294901760
        %398 = vmatprep.subr.mxu0 %v397
        %v399 = vand.u32 %v269, 4294901760
        %400 = vmatpush1.msra.mxu0 %v399
        %v401 = vand.u32 %v274, 4294901760
        %402 = vmatprep.subr.mxu0 %v401
        %v403 = vand.u32 %v273, 4294901760
        %404 = vmatpush1.msra.mxu0 %v403
        %v405 = vand.u32 %v278, 4294901760
        %406 = vmatprep.subr.mxu0 %v405
        %v407 = vand.u32 %v277, 4294901760
        %408 = vmatpush1.msra.mxu0 %v407
        %v409 = vand.u32 %v282, 4294901760
        %410 = vmatprep.subr.mxu0 %v409
        %v411 = vand.u32 %v281, 4294901760
        %412 = vmatpush1.msra.mxu0 %v411
        %v413 = vand.u32 %v286, 4294901760
        %414 = vmatprep.subr.mxu0 %v413
        %v415 = vand.u32 %v285, 4294901760
        %416 = vmatpush1.msra.mxu0 %v415
        %v417 = vand.u32 %v290, 4294901760
        %418 = vmatprep.subr.mxu0 %v417
        %v419 = vand.u32 %v289, 4294901760
        %420 = vmatpush1.msra.mxu0 %v419
        %v421 = vand.u32 %v294, 4294901760
        %422 = vmatprep.subr.mxu0 %v421
        %v423 = vand.u32 %v293, 4294901760
        %424 = vmatpush1.msra.mxu0 %v423
        %v425 = vand.u32 %v298, 4294901760
        %426 = vmatprep.subr.mxu0 %v425
        %v427 = vand.u32 %v297, 4294901760
        %428 = vmatpush1.msra.mxu0 %v427
        %v429 = vand.u32 %v302, 4294901760
        %430 = vmatprep.subr.mxu0 %v429
        %v431 = vand.u32 %v301, 4294901760
        %432 = vmatpush1.msra.mxu0 %v431
        %v433 = vand.u32 %v306, 4294901760
        %434 = vmatprep.subr.mxu0 %v433
        %v435 = vand.u32 %v305, 4294901760
        %436 = vmatpush1.msra.mxu0 %v435
        %v437 = vand.u32 %v310, 4294901760
        %438 = vmatprep.subr.mxu0 %v437
        %v439 = vand.u32 %v309, 4294901760
        %440 = vmatpush1.msra.mxu0 %v439
        %v441 = vand.u32 %v314, 4294901760
        %442 = vmatprep.subr.mxu0 %v441
        %v443 = vand.u32 %v313, 4294901760
        %444 = vmatpush1.msra.mxu0 %v443
        %v445 = vand.u32 %v318, 4294901760
        %446 = vmatprep.subr.mxu0 %v445
        %v447 = vand.u32 %v317, 4294901760
        %448 = vmatpush1.msra.mxu0 %v447
        %v449 = vand.u32 %v322, 4294901760
        %450 = vmatprep.subr.mxu0 %v449
        %v451 = vand.u32 %v321, 4294901760
        %452 = vmatpush1.msra.mxu0 %v451
        %v453 = vand.u32 %v326, 4294901760
        %454 = vmatprep.subr.mxu0 %v453
        %v455 = vand.u32 %v325, 4294901760
        %456 = vmatpush1.msra.mxu0 %v455
        %v457 = vand.u32 %v200, 4294901760
        %v458 = vsub.f32 %v200, %v457
        %v459 = vand.u32 %v458, 4294901760
        %v460 = vsub.f32 %v458, %v459
        %v461 = vand.u32 %v460, 4294901760
        %462 = vmatprep.mubr.f32.mxu0 %v461
        %v463 = vand.u32 %v199, 4294901760
        %v464 = vsub.f32 %v199, %v463
        %v465 = vand.u32 %v464, 4294901760
        %v466 = vsub.f32 %v464, %v465
        %v467 = vand.u32 %v466, 4294901760
        %468 = vmatmul.mubr.f32.gmra.mrb[0].mxu0 %v467
        %v469 = vpop.f32.mrb[0].mxu0
        %v470 = vadd.f32 0.0, %v469
        %v471 = vpop.f32.mrb[0].mxu0
        %v472 = vadd.f32 0.0, %v471
        %473 = vdwg.mxu0
        %v474 = vand.u32 %v202, 4294901760
        %v475 = vsub.f32 %v202, %v474
        %v476 = vand.u32 %v475, 4294901760
        %v477 = vsub.f32 %v475, %v476
        %v478 = vand.u32 %v477, 4294901760
        %479 = vmatprep.subr.mxu0 %v478
        %v480 = vand.u32 %v201, 4294901760
        %v481 = vsub.f32 %v201, %v480
        %v482 = vand.u32 %v481, 4294901760
        %v483 = vsub.f32 %v481, %v482
        %v484 = vand.u32 %v483, 4294901760
        %485 = vmatpush1.msra.mxu0 %v484
        %v486 = vand.u32 %v206, 4294901760
        %v487 = vsub.f32 %v206, %v486
        %v488 = vand.u32 %v487, 4294901760
        %v489 = vsub.f32 %v487, %v488
        %v490 = vand.u32 %v489, 4294901760
        %491 = vmatprep.subr.mxu0 %v490
        %v492 = vand.u32 %v205, 4294901760
        %v493 = vsub.f32 %v205, %v492
        %v494 = vand.u32 %v493, 4294901760
        %v495 = vsub.f32 %v493, %v494
        %v496 = vand.u32 %v495, 4294901760
        %497 = vmatpush1.msra.mxu0 %v496
        %v498 = vand.u32 %v210, 4294901760
        %v499 = vsub.f32 %v210, %v498
        %v500 = vand.u32 %v499, 4294901760
        %v501 = vsub.f32 %v499, %v500
        %v502 = vand.u32 %v501, 4294901760
        %503 = vmatprep.subr.mxu0 %v502
        %v504 = vand.u32 %v209, 4294901760
        %v505 = vsub.f32 %v209, %v504
        %v506 = vand.u32 %v505, 4294901760
        %v507 = vsub.f32 %v505, %v506
        %v508 = vand.u32 %v507, 4294901760
        %509 = vmatpush1.msra.mxu0 %v508
        %v510 = vand.u32 %v214, 4294901760
        %v511 = vsub.f32 %v214, %v510
        %v512 = vand.u32 %v511, 4294901760
        %v513 = vsub.f32 %v511, %v512
        %v514 = vand.u32 %v513, 4294901760
        %515 = vmatprep.subr.mxu0 %v514
        %v516 = vand.u32 %v213, 4294901760
        %v517 = vsub.f32 %v213, %v516
        %v518 = vand.u32 %v517, 4294901760
        %v519 = vsub.f32 %v517, %v518
        %v520 = vand.u32 %v519, 4294901760
        %521 = vmatpush1.msra.mxu0 %v520
        %v522 = vand.u32 %v218, 4294901760
        %v523 = vsub.f32 %v218, %v522
        %v524 = vand.u32 %v523, 4294901760
        %v525 = vsub.f32 %v523, %v524
        %v526 = vand.u32 %v525, 4294901760
        %527 = vmatprep.subr.mxu0 %v526
        %v528 = vand.u32 %v217, 4294901760
        %v529 = vsub.f32 %v217, %v528
        %v530 = vand.u32 %v529, 4294901760
        %v531 = vsub.f32 %v529, %v530
        %v532 = vand.u32 %v531, 4294901760
        %533 = vmatpush1.msra.mxu0 %v532
        %v534 = vand.u32 %v222, 4294901760
        %v535 = vsub.f32 %v222, %v534
        %v536 = vand.u32 %v535, 4294901760
        %v537 = vsub.f32 %v535, %v536
        %v538 = vand.u32 %v537, 4294901760
        %539 = vmatprep.subr.mxu0 %v538
        %v540 = vand.u32 %v221, 4294901760
        %v541 = vsub.f32 %v221, %v540
        %v542 = vand.u32 %v541, 4294901760
        %v543 = vsub.f32 %v541, %v542
        %v544 = vand.u32 %v543, 4294901760
        %545 = vmatpush1.msra.mxu0 %v544
        %v546 = vand.u32 %v226, 4294901760
        %v547 = vsub.f32 %v226, %v546
        %v548 = vand.u32 %v547, 4294901760
        %v549 = vsub.f32 %v547, %v548
        %v550 = vand.u32 %v549, 4294901760
        %551 = vmatprep.subr.mxu0 %v550
        %v552 = vand.u32 %v225, 4294901760
        %v553 = vsub.f32 %v225, %v552
        %v554 = vand.u32 %v553, 4294901760
        %v555 = vsub.f32 %v553, %v554
        %v556 = vand.u32 %v555, 4294901760
        %557 = vmatpush1.msra.mxu0 %v556
        %v558 = vand.u32 %v230, 4294901760
        %v559 = vsub.f32 %v230, %v558
        %v560 = vand.u32 %v559, 4294901760
        %v561 = vsub.f32 %v559, %v560
        %v562 = vand.u32 %v561, 4294901760
        %563 = vmatprep.subr.mxu0 %v562
        %v564 = vand.u32 %v229, 4294901760
        %v565 = vsub.f32 %v229, %v564
        %v566 = vand.u32 %v565, 4294901760
        %v567 = vsub.f32 %v565, %v566
        %v568 = vand.u32 %v567, 4294901760
        %569 = vmatpush1.msra.mxu0 %v568
        %v570 = vand.u32 %v234, 4294901760
        %v571 = vsub.f32 %v234, %v570
        %v572 = vand.u32 %v571, 4294901760
        %v573 = vsub.f32 %v571, %v572
        %v574 = vand.u32 %v573, 4294901760
        %575 = vmatprep.subr.mxu0 %v574
        %v576 = vand.u32 %v233, 4294901760
        %v577 = vsub.f32 %v233, %v576
        %v578 = vand.u32 %v577, 4294901760
        %v579 = vsub.f32 %v577, %v578
        %v580 = vand.u32 %v579, 4294901760
        %581 = vmatpush1.msra.mxu0 %v580
        %v582 = vand.u32 %v238, 4294901760
        %v583 = vsub.f32 %v238, %v582
        %v584 = vand.u32 %v583, 4294901760
        %v585 = vsub.f32 %v583, %v584
        %v586 = vand.u32 %v585, 4294901760
        %587 = vmatprep.subr.mxu0 %v586
        %v588 = vand.u32 %v237, 4294901760
        %v589 = vsub.f32 %v237, %v588
        %v590 = vand.u32 %v589, 4294901760
        %v591 = vsub.f32 %v589, %v590
        %v592 = vand.u32 %v591, 4294901760
        %593 = vmatpush1.msra.mxu0 %v592
        %v594 = vand.u32 %v242, 4294901760
        %v595 = vsub.f32 %v242, %v594
        %v596 = vand.u32 %v595, 4294901760
        %v597 = vsub.f32 %v595, %v596
        %v598 = vand.u32 %v597, 4294901760
        %599 = vmatprep.subr.mxu0 %v598
        %v600 = vand.u32 %v241, 4294901760
        %v601 = vsub.f32 %v241, %v600
        %v602 = vand.u32 %v601, 4294901760
        %v603 = vsub.f32 %v601, %v602
        %v604 = vand.u32 %v603, 4294901760
        %605 = vmatpush1.msra.mxu0 %v604
        %v606 = vand.u32 %v246, 4294901760
        %v607 = vsub.f32 %v246, %v606
        %v608 = vand.u32 %v607, 4294901760
        %v609 = vsub.f32 %v607, %v608
        %v610 = vand.u32 %v609, 4294901760
        %611 = vmatprep.subr.mxu0 %v610
        %v612 = vand.u32 %v245, 4294901760
        %v613 = vsub.f32 %v245, %v612
        %v614 = vand.u32 %v613, 4294901760
        %v615 = vsub.f32 %v613, %v614
        %v616 = vand.u32 %v615, 4294901760
        %617 = vmatpush1.msra.mxu0 %v616
        %v618 = vand.u32 %v250, 4294901760
        %v619 = vsub.f32 %v250, %v618
        %v620 = vand.u32 %v619, 4294901760
        %v621 = vsub.f32 %v619, %v620
        %v622 = vand.u32 %v621, 4294901760
        %623 = vmatprep.subr.mxu0 %v622
        %v624 = vand.u32 %v249, 4294901760
        %v625 = vsub.f32 %v249, %v624
        %v626 = vand.u32 %v625, 4294901760
        %v627 = vsub.f32 %v625, %v626
        %v628 = vand.u32 %v627, 4294901760
        %629 = vmatpush1.msra.mxu0 %v628
        %v630 = vand.u32 %v254, 4294901760
        %v631 = vsub.f32 %v254, %v630
        %v632 = vand.u32 %v631, 4294901760
        %v633 = vsub.f32 %v631, %v632
        %v634 = vand.u32 %v633, 4294901760
        %635 = vmatprep.subr.mxu0 %v634
        %v636 = vand.u32 %v253, 4294901760
        %v637 = vsub.f32 %v253, %v636
        %v638 = vand.u32 %v637, 4294901760
        %v639 = vsub.f32 %v637, %v638
        %v640 = vand.u32 %v639, 4294901760
        %641 = vmatpush1.msra.mxu0 %v640
        %v642 = vand.u32 %v258, 4294901760
        %v643 = vsub.f32 %v258, %v642
        %v644 = vand.u32 %v643, 4294901760
        %v645 = vsub.f32 %v643, %v644
        %v646 = vand.u32 %v645, 4294901760
        %647 = vmatprep.subr.mxu0 %v646
        %v648 = vand.u32 %v257, 4294901760
        %v649 = vsub.f32 %v257, %v648
        %v650 = vand.u32 %v649, 4294901760
        %v651 = vsub.f32 %v649, %v650
        %v652 = vand.u32 %v651, 4294901760
        %653 = vmatpush1.msra.mxu0 %v652
        %v654 = vand.u32 %v262, 4294901760
        %v655 = vsub.f32 %v262, %v654
        %v656 = vand.u32 %v655, 4294901760
        %v657 = vsub.f32 %v655, %v656
        %v658 = vand.u32 %v657, 4294901760
        %659 = vmatprep.subr.mxu0 %v658
        %v660 = vand.u32 %v261, 4294901760
        %v661 = vsub.f32 %v261, %v660
        %v662 = vand.u32 %v661, 4294901760
        %v663 = vsub.f32 %v661, %v662
        %v664 = vand.u32 %v663, 4294901760
        %665 = vmatpush1.msra.mxu0 %v664
        %v666 = vand.u32 %v266, 4294901760
        %v667 = vsub.f32 %v266, %v666
        %v668 = vand.u32 %v667, 4294901760
        %v669 = vsub.f32 %v667, %v668
        %v670 = vand.u32 %v669, 4294901760
        %671 = vmatprep.subr.mxu0 %v670
        %v672 = vand.u32 %v265, 4294901760
        %v673 = vsub.f32 %v265, %v672
        %v674 = vand.u32 %v673, 4294901760
        %v675 = vsub.f32 %v673, %v674
        %v676 = vand.u32 %v675, 4294901760
        %677 = vmatpush1.msra.mxu0 %v676
        %v678 = vand.u32 %v270, 4294901760
        %v679 = vsub.f32 %v270, %v678
        %v680 = vand.u32 %v679, 4294901760
        %v681 = vsub.f32 %v679, %v680
        %v682 = vand.u32 %v681, 4294901760
        %683 = vmatprep.subr.mxu0 %v682
        %v684 = vand.u32 %v269, 4294901760
        %v685 = vsub.f32 %v269, %v684
        %v686 = vand.u32 %v685, 4294901760
        %v687 = vsub.f32 %v685, %v686
        %v688 = vand.u32 %v687, 4294901760
        %689 = vmatpush1.msra.mxu0 %v688
        %v690 = vand.u32 %v274, 4294901760
        %v691 = vsub.f32 %v274, %v690
        %v692 = vand.u32 %v691, 4294901760
        %v693 = vsub.f32 %v691, %v692
        %v694 = vand.u32 %v693, 4294901760
        %695 = vmatprep.subr.mxu0 %v694
        %v696 = vand.u32 %v273, 4294901760
        %v697 = vsub.f32 %v273, %v696
        %v698 = vand.u32 %v697, 4294901760
        %v699 = vsub.f32 %v697, %v698
        %v700 = vand.u32 %v699, 4294901760
        %701 = vmatpush1.msra.mxu0 %v700
        %v702 = vand.u32 %v278, 4294901760
        %v703 = vsub.f32 %v278, %v702
        %v704 = vand.u32 %v703, 4294901760
        %v705 = vsub.f32 %v703, %v704
        %v706 = vand.u32 %v705, 4294901760
        %707 = vmatprep.subr.mxu0 %v706
        %v708 = vand.u32 %v277, 4294901760
        %v709 = vsub.f32 %v277, %v708
        %v710 = vand.u32 %v709, 4294901760
        %v711 = vsub.f32 %v709, %v710
        %v712 = vand.u32 %v711, 4294901760
        %713 = vmatpush1.msra.mxu0 %v712
        %v714 = vand.u32 %v282, 4294901760
        %v715 = vsub.f32 %v282, %v714
        %v716 = vand.u32 %v715, 4294901760
        %v717 = vsub.f32 %v715, %v716
        %v718 = vand.u32 %v717, 4294901760
        %719 = vmatprep.subr.mxu0 %v718
        %v720 = vand.u32 %v281, 4294901760
        %v721 = vsub.f32 %v281, %v720
        %v722 = vand.u32 %v721, 4294901760
        %v723 = vsub.f32 %v721, %v722
        %v724 = vand.u32 %v723, 4294901760
        %725 = vmatpush1.msra.mxu0 %v724
        %v726 = vand.u32 %v286, 4294901760
        %v727 = vsub.f32 %v286, %v726
        %v728 = vand.u32 %v727, 4294901760
        %v729 = vsub.f32 %v727, %v728
        %v730 = vand.u32 %v729, 4294901760
        %731 = vmatprep.subr.mxu0 %v730
        %v732 = vand.u32 %v285, 4294901760
        %v733 = vsub.f32 %v285, %v732
        %v734 = vand.u32 %v733, 4294901760
        %v735 = vsub.f32 %v733, %v734
        %v736 = vand.u32 %v735, 4294901760
        %737 = vmatpush1.msra.mxu0 %v736
        %v738 = vand.u32 %v290, 4294901760
        %v739 = vsub.f32 %v290, %v738
        %v740 = vand.u32 %v739, 4294901760
        %v741 = vsub.f32 %v739, %v740
        %v742 = vand.u32 %v741, 4294901760
        %743 = vmatprep.subr.mxu0 %v742
        %v744 = vand.u32 %v289, 4294901760
        %v745 = vsub.f32 %v289, %v744
        %v746 = vand.u32 %v745, 4294901760
        %v747 = vsub.f32 %v745, %v746
        %v748 = vand.u32 %v747, 4294901760
        %749 = vmatpush1.msra.mxu0 %v748
        %v750 = vand.u32 %v294, 4294901760
        %v751 = vsub.f32 %v294, %v750
        %v752 = vand.u32 %v751, 4294901760
        %v753 = vsub.f32 %v751, %v752
        %v754 = vand.u32 %v753, 4294901760
        %755 = vmatprep.subr.mxu0 %v754
        %v756 = vand.u32 %v293, 4294901760
        %v757 = vsub.f32 %v293, %v756
        %v758 = vand.u32 %v757, 4294901760
        %v759 = vsub.f32 %v757, %v758
        %v760 = vand.u32 %v759, 4294901760
        %761 = vmatpush1.msra.mxu0 %v760
        %v762 = vand.u32 %v298, 4294901760
        %v763 = vsub.f32 %v298, %v762
        %v764 = vand.u32 %v763, 4294901760
        %v765 = vsub.f32 %v763, %v764
        %v766 = vand.u32 %v765, 4294901760
        %767 = vmatprep.subr.mxu0 %v766
        %v768 = vand.u32 %v297, 4294901760
        %v769 = vsub.f32 %v297, %v768
        %v770 = vand.u32 %v769, 4294901760
        %v771 = vsub.f32 %v769, %v770
        %v772 = vand.u32 %v771, 4294901760
        %773 = vmatpush1.msra.mxu0 %v772
        %v774 = vand.u32 %v302, 4294901760
        %v775 = vsub.f32 %v302, %v774
        %v776 = vand.u32 %v775, 4294901760
        %v777 = vsub.f32 %v775, %v776
        %v778 = vand.u32 %v777, 4294901760
        %779 = vmatprep.subr.mxu0 %v778
        %v780 = vand.u32 %v301, 4294901760
        %v781 = vsub.f32 %v301, %v780
        %v782 = vand.u32 %v781, 4294901760
        %v783 = vsub.f32 %v781, %v782
        %v784 = vand.u32 %v783, 4294901760
        %785 = vmatpush1.msra.mxu0 %v784
        %v786 = vand.u32 %v306, 4294901760
        %v787 = vsub.f32 %v306, %v786
        %v788 = vand.u32 %v787, 4294901760
        %v789 = vsub.f32 %v787, %v788
        %v790 = vand.u32 %v789, 4294901760
        %791 = vmatprep.subr.mxu0 %v790
        %v792 = vand.u32 %v305, 4294901760
        %v793 = vsub.f32 %v305, %v792
        %v794 = vand.u32 %v793, 4294901760
        %v795 = vsub.f32 %v793, %v794
        %v796 = vand.u32 %v795, 4294901760
        %797 = vmatpush1.msra.mxu0 %v796
        %v798 = vand.u32 %v310, 4294901760
        %v799 = vsub.f32 %v310, %v798
        %v800 = vand.u32 %v799, 4294901760
        %v801 = vsub.f32 %v799, %v800
        %v802 = vand.u32 %v801, 4294901760
        %803 = vmatprep.subr.mxu0 %v802
        %v804 = vand.u32 %v309, 4294901760
        %v805 = vsub.f32 %v309, %v804
        %v806 = vand.u32 %v805, 4294901760
        %v807 = vsub.f32 %v805, %v806
        %v808 = vand.u32 %v807, 4294901760
        %809 = vmatpush1.msra.mxu0 %v808
        %v810 = vand.u32 %v314, 4294901760
        %v811 = vsub.f32 %v314, %v810
        %v812 = vand.u32 %v811, 4294901760
        %v813 = vsub.f32 %v811, %v812
        %v814 = vand.u32 %v813, 4294901760
        %815 = vmatprep.subr.mxu0 %v814
        %v816 = vand.u32 %v313, 4294901760
        %v817 = vsub.f32 %v313, %v816
        %v818 = vand.u32 %v817, 4294901760
        %v819 = vsub.f32 %v817, %v818
        %v820 = vand.u32 %v819, 4294901760
        %821 = vmatpush1.msra.mxu0 %v820
        %v822 = vand.u32 %v318, 4294901760
        %v823 = vsub.f32 %v318, %v822
        %v824 = vand.u32 %v823, 4294901760
        %v825 = vsub.f32 %v823, %v824
        %v826 = vand.u32 %v825, 4294901760
        %827 = vmatprep.subr.mxu0 %v826
        %v828 = vand.u32 %v317, 4294901760
        %v829 = vsub.f32 %v317, %v828
        %v830 = vand.u32 %v829, 4294901760
        %v831 = vsub.f32 %v829, %v830
        %v832 = vand.u32 %v831, 4294901760
        %833 = vmatpush1.msra.mxu0 %v832
        %v834 = vand.u32 %v322, 4294901760
        %v835 = vsub.f32 %v322, %v834
        %v836 = vand.u32 %v835, 4294901760
        %v837 = vsub.f32 %v835, %v836
        %v838 = vand.u32 %v837, 4294901760
        %839 = vmatprep.subr.mxu0 %v838
        %v840 = vand.u32 %v321, 4294901760
        %v841 = vsub.f32 %v321, %v840
        %v842 = vand.u32 %v841, 4294901760
        %v843 = vsub.f32 %v841, %v842
        %v844 = vand.u32 %v843, 4294901760
        %845 = vmatpush1.msra.mxu0 %v844
        %v846 = vand.u32 %v326, 4294901760
        %v847 = vsub.f32 %v326, %v846
        %v848 = vand.u32 %v847, 4294901760
        %v849 = vsub.f32 %v847, %v848
        %v850 = vand.u32 %v849, 4294901760
        %851 = vmatprep.subr.mxu0 %v850
        %v852 = vand.u32 %v325, 4294901760
        %v853 = vsub.f32 %v325, %v852
        %v854 = vand.u32 %v853, 4294901760
        %v855 = vsub.f32 %v853, %v854
        %v856 = vand.u32 %v855, 4294901760
        %857 = vmatpush1.msra.mxu0 %v856
        %v858 = vand.u32 %v200, 4294901760
        %859 = vmatprep.mubr.f32.mxu0 %v858
        %v860 = vand.u32 %v199, 4294901760
        %861 = vmatmul.mubr.f32.gmra.mrb[0].mxu0 %v860
        %v862 = vpop.f32.mrb[0].mxu0
        %v863 = vadd.f32 %v470, %v862
        %v864 = vpop.f32.mrb[0].mxu0
        %v865 = vadd.f32 %v472, %v864
        %866 = vdwg.mxu0
        %v867 = vand.u32 %v202, 4294901760
        %v868 = vsub.f32 %v202, %v867
        %869 = vmatprep.subr.mxu0 %v868
        %v870 = vand.u32 %v201, 4294901760
        %v871 = vsub.f32 %v201, %v870
        %872 = vmatpush1.msra.mxu0 %v871
        %v873 = vand.u32 %v206, 4294901760
        %v874 = vsub.f32 %v206, %v873
        %875 = vmatprep.subr.mxu0 %v874
        %v876 = vand.u32 %v205, 4294901760
        %v877 = vsub.f32 %v205, %v876
        %878 = vmatpush1.msra.mxu0 %v877
        %v879 = vand.u32 %v210, 4294901760
        %v880 = vsub.f32 %v210, %v879
        %881 = vmatprep.subr.mxu0 %v880
        %v882 = vand.u32 %v209, 4294901760
        %v883 = vsub.f32 %v209, %v882
        %884 = vmatpush1.msra.mxu0 %v883
        %v885 = vand.u32 %v214, 4294901760
        %v886 = vsub.f32 %v214, %v885
        %887 = vmatprep.subr.mxu0 %v886
        %v888 = vand.u32 %v213, 4294901760
        %v889 = vsub.f32 %v213, %v888
        %890 = vmatpush1.msra.mxu0 %v889
        %v891 = vand.u32 %v218, 4294901760
        %v892 = vsub.f32 %v218, %v891
        %893 = vmatprep.subr.mxu0 %v892
        %v894 = vand.u32 %v217, 4294901760
        %v895 = vsub.f32 %v217, %v894
        %896 = vmatpush1.msra.mxu0 %v895
        %v897 = vand.u32 %v222, 4294901760
        %v898 = vsub.f32 %v222, %v897
        %899 = vmatprep.subr.mxu0 %v898
        %v900 = vand.u32 %v221, 4294901760
        %v901 = vsub.f32 %v221, %v900
        %902 = vmatpush1.msra.mxu0 %v901
        %v903 = vand.u32 %v226, 4294901760
        %v904 = vsub.f32 %v226, %v903
        %905 = vmatprep.subr.mxu0 %v904
        %v906 = vand.u32 %v225, 4294901760
        %v907 = vsub.f32 %v225, %v906
        %908 = vmatpush1.msra.mxu0 %v907
        %v909 = vand.u32 %v230, 4294901760
        %v910 = vsub.f32 %v230, %v909
        %911 = vmatprep.subr.mxu0 %v910
        %v912 = vand.u32 %v229, 4294901760
        %v913 = vsub.f32 %v229, %v912
        %914 = vmatpush1.msra.mxu0 %v913
        %v915 = vand.u32 %v234, 4294901760
        %v916 = vsub.f32 %v234, %v915
        %917 = vmatprep.subr.mxu0 %v916
        %v918 = vand.u32 %v233, 4294901760
        %v919 = vsub.f32 %v233, %v918
        %920 = vmatpush1.msra.mxu0 %v919
        %v921 = vand.u32 %v238, 4294901760
        %v922 = vsub.f32 %v238, %v921
        %923 = vmatprep.subr.mxu0 %v922
        %v924 = vand.u32 %v237, 4294901760
        %v925 = vsub.f32 %v237, %v924
        %926 = vmatpush1.msra.mxu0 %v925
        %v927 = vand.u32 %v242, 4294901760
        %v928 = vsub.f32 %v242, %v927
        %929 = vmatprep.subr.mxu0 %v928
        %v930 = vand.u32 %v241, 4294901760
        %v931 = vsub.f32 %v241, %v930
        %932 = vmatpush1.msra.mxu0 %v931
        %v933 = vand.u32 %v246, 4294901760
        %v934 = vsub.f32 %v246, %v933
        %935 = vmatprep.subr.mxu0 %v934
        %v936 = vand.u32 %v245, 4294901760
        %v937 = vsub.f32 %v245, %v936
        %938 = vmatpush1.msra.mxu0 %v937
        %v939 = vand.u32 %v250, 4294901760
        %v940 = vsub.f32 %v250, %v939
        %941 = vmatprep.subr.mxu0 %v940
        %v942 = vand.u32 %v249, 4294901760
        %v943 = vsub.f32 %v249, %v942
        %944 = vmatpush1.msra.mxu0 %v943
        %v945 = vand.u32 %v254, 4294901760
        %v946 = vsub.f32 %v254, %v945
        %947 = vmatprep.subr.mxu0 %v946
        %v948 = vand.u32 %v253, 4294901760
        %v949 = vsub.f32 %v253, %v948
        %950 = vmatpush1.msra.mxu0 %v949
        %v951 = vand.u32 %v258, 4294901760
        %v952 = vsub.f32 %v258, %v951
        %953 = vmatprep.subr.mxu0 %v952
        %v954 = vand.u32 %v257, 4294901760
        %v955 = vsub.f32 %v257, %v954
        %956 = vmatpush1.msra.mxu0 %v955
        %v957 = vand.u32 %v262, 4294901760
        %v958 = vsub.f32 %v262, %v957
        %959 = vmatprep.subr.mxu0 %v958
        %v960 = vand.u32 %v261, 4294901760
        %v961 = vsub.f32 %v261, %v960
        %962 = vmatpush1.msra.mxu0 %v961
        %v963 = vand.u32 %v266, 4294901760
        %v964 = vsub.f32 %v266, %v963
        %965 = vmatprep.subr.mxu0 %v964
        %v966 = vand.u32 %v265, 4294901760
        %v967 = vsub.f32 %v265, %v966
        %968 = vmatpush1.msra.mxu0 %v967
        %v969 = vand.u32 %v270, 4294901760
        %v970 = vsub.f32 %v270, %v969
        %971 = vmatprep.subr.mxu0 %v970
        %v972 = vand.u32 %v269, 4294901760
        %v973 = vsub.f32 %v269, %v972
        %974 = vmatpush1.msra.mxu0 %v973
        %v975 = vand.u32 %v274, 4294901760
        %v976 = vsub.f32 %v274, %v975
        %977 = vmatprep.subr.mxu0 %v976
        %v978 = vand.u32 %v273, 4294901760
        %v979 = vsub.f32 %v273, %v978
        %980 = vmatpush1.msra.mxu0 %v979
        %v981 = vand.u32 %v278, 4294901760
        %v982 = vsub.f32 %v278, %v981
        %983 = vmatprep.subr.mxu0 %v982
        %v984 = vand.u32 %v277, 4294901760
        %v985 = vsub.f32 %v277, %v984
        %986 = vmatpush1.msra.mxu0 %v985
        %v987 = vand.u32 %v282, 4294901760
        %v988 = vsub.f32 %v282, %v987
        %989 = vmatprep.subr.mxu0 %v988
        %v990 = vand.u32 %v281, 4294901760
        %v991 = vsub.f32 %v281, %v990
        %992 = vmatpush1.msra.mxu0 %v991
        %v993 = vand.u32 %v286, 4294901760
        %v994 = vsub.f32 %v286, %v993
        %995 = vmatprep.subr.mxu0 %v994
        %v996 = vand.u32 %v285, 4294901760
        %v997 = vsub.f32 %v285, %v996
        %998 = vmatpush1.msra.mxu0 %v997
        %v999 = vand.u32 %v290, 4294901760
        %v1000 = vsub.f32 %v290, %v999
        %1001 = vmatprep.subr.mxu0 %v1000
        %v1002 = vand.u32 %v289, 4294901760
        %v1003 = vsub.f32 %v289, %v1002
        %1004 = vmatpush1.msra.mxu0 %v1003
        %v1005 = vand.u32 %v294, 4294901760
        %v1006 = vsub.f32 %v294, %v1005
        %1007 = vmatprep.subr.mxu0 %v1006
        %v1008 = vand.u32 %v293, 4294901760
        %v1009 = vsub.f32 %v293, %v1008
        %1010 = vmatpush1.msra.mxu0 %v1009
        %v1011 = vand.u32 %v298, 4294901760
        %v1012 = vsub.f32 %v298, %v1011
        %1013 = vmatprep.subr.mxu0 %v1012
        %v1014 = vand.u32 %v297, 4294901760
        %v1015 = vsub.f32 %v297, %v1014
        %1016 = vmatpush1.msra.mxu0 %v1015
        %v1017 = vand.u32 %v302, 4294901760
        %v1018 = vsub.f32 %v302, %v1017
        %1019 = vmatprep.subr.mxu0 %v1018
        %v1020 = vand.u32 %v301, 4294901760
        %v1021 = vsub.f32 %v301, %v1020
        %1022 = vmatpush1.msra.mxu0 %v1021
        %v1023 = vand.u32 %v306, 4294901760
        %v1024 = vsub.f32 %v306, %v1023
        %1025 = vmatprep.subr.mxu0 %v1024
        %v1026 = vand.u32 %v305, 4294901760
        %v1027 = vsub.f32 %v305, %v1026
        %1028 = vmatpush1.msra.mxu0 %v1027
        %v1029 = vand.u32 %v310, 4294901760
        %v1030 = vsub.f32 %v310, %v1029
        %1031 = vmatprep.subr.mxu0 %v1030
        %v1032 = vand.u32 %v309, 4294901760
        %v1033 = vsub.f32 %v309, %v1032
        %1034 = vmatpush1.msra.mxu0 %v1033
        %v1035 = vand.u32 %v314, 4294901760
        %v1036 = vsub.f32 %v314, %v1035
        %1037 = vmatprep.subr.mxu0 %v1036
        %v1038 = vand.u32 %v313, 4294901760
        %v1039 = vsub.f32 %v313, %v1038
        %1040 = vmatpush1.msra.mxu0 %v1039
        %v1041 = vand.u32 %v318, 4294901760
        %v1042 = vsub.f32 %v318, %v1041
        %1043 = vmatprep.subr.mxu0 %v1042
        %v1044 = vand.u32 %v317, 4294901760
        %v1045 = vsub.f32 %v317, %v1044
        %1046 = vmatpush1.msra.mxu0 %v1045
        %v1047 = vand.u32 %v322, 4294901760
        %v1048 = vsub.f32 %v322, %v1047
        %1049 = vmatprep.subr.mxu0 %v1048
        %v1050 = vand.u32 %v321, 4294901760
        %v1051 = vsub.f32 %v321, %v1050
        %1052 = vmatpush1.msra.mxu0 %v1051
        %v1053 = vand.u32 %v326, 4294901760
        %v1054 = vsub.f32 %v326, %v1053
        %1055 = vmatprep.subr.mxu0 %v1054
        %v1056 = vand.u32 %v325, 4294901760
        %v1057 = vsub.f32 %v325, %v1056
        %1058 = vmatpush1.msra.mxu0 %v1057
        %v1059 = vand.u32 %v200, 4294901760
        %v1060 = vsub.f32 %v200, %v1059
        %1061 = vmatprep.mubr.f32.mxu0 %v1060
        %v1062 = vand.u32 %v199, 4294901760
        %v1063 = vsub.f32 %v199, %v1062
        %1064 = vmatmul.mubr.f32.gmra.mrb[0].mxu0 %v1063
        %v1065 = vpop.f32.mrb[0].mxu0
        %v1066 = vadd.f32 %v863, %v1065
        %v1067 = vpop.f32.mrb[0].mxu0
        %v1068 = vadd.f32 %v865, %v1067
        %1069 = vdwg.mxu0
        %v1070 = vand.u32 %v202, 4294901760
        %1071 = vmatprep.subr.mxu0 %v1070
        %v1072 = vand.u32 %v201, 4294901760
        %1073 = vmatpush1.msra.mxu0 %v1072
        %v1074 = vand.u32 %v206, 4294901760
        %1075 = vmatprep.subr.mxu0 %v1074
        %v1076 = vand.u32 %v205, 4294901760
        %1077 = vmatpush1.msra.mxu0 %v1076
        %v1078 = vand.u32 %v210, 4294901760
        %1079 = vmatprep.subr.mxu0 %v1078
        %v1080 = vand.u32 %v209, 4294901760
        %1081 = vmatpush1.msra.mxu0 %v1080
        %v1082 = vand.u32 %v214, 4294901760
        %1083 = vmatprep.subr.mxu0 %v1082
        %v1084 = vand.u32 %v213, 4294901760
        %1085 = vmatpush1.msra.mxu0 %v1084
        %v1086 = vand.u32 %v218, 4294901760
        %1087 = vmatprep.subr.mxu0 %v1086
        %v1088 = vand.u32 %v217, 4294901760
        %1089 = vmatpush1.msra.mxu0 %v1088
        %v1090 = vand.u32 %v222, 4294901760
        %1091 = vmatprep.subr.mxu0 %v1090
        %v1092 = vand.u32 %v221, 4294901760
        %1093 = vmatpush1.msra.mxu0 %v1092
        %v1094 = vand.u32 %v226, 4294901760
        %1095 = vmatprep.subr.mxu0 %v1094
        %v1096 = vand.u32 %v225, 4294901760
        %1097 = vmatpush1.msra.mxu0 %v1096
        %v1098 = vand.u32 %v230, 4294901760
        %1099 = vmatprep.subr.mxu0 %v1098
        %v1100 = vand.u32 %v229, 4294901760
        %1101 = vmatpush1.msra.mxu0 %v1100
        %v1102 = vand.u32 %v234, 4294901760
        %1103 = vmatprep.subr.mxu0 %v1102
        %v1104 = vand.u32 %v233, 4294901760
        %1105 = vmatpush1.msra.mxu0 %v1104
        %v1106 = vand.u32 %v238, 4294901760
        %1107 = vmatprep.subr.mxu0 %v1106
        %v1108 = vand.u32 %v237, 4294901760
        %1109 = vmatpush1.msra.mxu0 %v1108
        %v1110 = vand.u32 %v242, 4294901760
        %1111 = vmatprep.subr.mxu0 %v1110
        %v1112 = vand.u32 %v241, 4294901760
        %1113 = vmatpush1.msra.mxu0 %v1112
        %v1114 = vand.u32 %v246, 4294901760
        %1115 = vmatprep.subr.mxu0 %v1114
        %v1116 = vand.u32 %v245, 4294901760
        %1117 = vmatpush1.msra.mxu0 %v1116
        %v1118 = vand.u32 %v250, 4294901760
        %1119 = vmatprep.subr.mxu0 %v1118
        %v1120 = vand.u32 %v249, 4294901760
        %1121 = vmatpush1.msra.mxu0 %v1120
        %v1122 = vand.u32 %v254, 4294901760
        %1123 = vmatprep.subr.mxu0 %v1122
        %v1124 = vand.u32 %v253, 4294901760
        %1125 = vmatpush1.msra.mxu0 %v1124
        %v1126 = vand.u32 %v258, 4294901760
        %1127 = vmatprep.subr.mxu0 %v1126
        %v1128 = vand.u32 %v257, 4294901760
        %1129 = vmatpush1.msra.mxu0 %v1128
        %v1130 = vand.u32 %v262, 4294901760
        %1131 = vmatprep.subr.mxu0 %v1130
        %v1132 = vand.u32 %v261, 4294901760
        %1133 = vmatpush1.msra.mxu0 %v1132
        %v1134 = vand.u32 %v266, 4294901760
        %1135 = vmatprep.subr.mxu0 %v1134
        %v1136 = vand.u32 %v265, 4294901760
        %1137 = vmatpush1.msra.mxu0 %v1136
        %v1138 = vand.u32 %v270, 4294901760
        %1139 = vmatprep.subr.mxu0 %v1138
        %v1140 = vand.u32 %v269, 4294901760
        %1141 = vmatpush1.msra.mxu0 %v1140
        %v1142 = vand.u32 %v274, 4294901760
        %1143 = vmatprep.subr.mxu0 %v1142
        %v1144 = vand.u32 %v273, 4294901760
        %1145 = vmatpush1.msra.mxu0 %v1144
        %v1146 = vand.u32 %v278, 4294901760
        %1147 = vmatprep.subr.mxu0 %v1146
        %v1148 = vand.u32 %v277, 4294901760
        %1149 = vmatpush1.msra.mxu0 %v1148
        %v1150 = vand.u32 %v282, 4294901760
        %1151 = vmatprep.subr.mxu0 %v1150
        %v1152 = vand.u32 %v281, 4294901760
        %1153 = vmatpush1.msra.mxu0 %v1152
        %v1154 = vand.u32 %v286, 4294901760
        %1155 = vmatprep.subr.mxu0 %v1154
        %v1156 = vand.u32 %v285, 4294901760
        %1157 = vmatpush1.msra.mxu0 %v1156
        %v1158 = vand.u32 %v290, 4294901760
        %1159 = vmatprep.subr.mxu0 %v1158
        %v1160 = vand.u32 %v289, 4294901760
        %1161 = vmatpush1.msra.mxu0 %v1160
        %v1162 = vand.u32 %v294, 4294901760
        %1163 = vmatprep.subr.mxu0 %v1162
        %v1164 = vand.u32 %v293, 4294901760
        %1165 = vmatpush1.msra.mxu0 %v1164
        %v1166 = vand.u32 %v298, 4294901760
        %1167 = vmatprep.subr.mxu0 %v1166
        %v1168 = vand.u32 %v297, 4294901760
        %1169 = vmatpush1.msra.mxu0 %v1168
        %v1170 = vand.u32 %v302, 4294901760
        %1171 = vmatprep.subr.mxu0 %v1170
        %v1172 = vand.u32 %v301, 4294901760
        %1173 = vmatpush1.msra.mxu0 %v1172
        %v1174 = vand.u32 %v306, 4294901760
        %1175 = vmatprep.subr.mxu0 %v1174
        %v1176 = vand.u32 %v305, 4294901760
        %1177 = vmatpush1.msra.mxu0 %v1176
        %v1178 = vand.u32 %v310, 4294901760
        %1179 = vmatprep.subr.mxu0 %v1178
        %v1180 = vand.u32 %v309, 4294901760
        %1181 = vmatpush1.msra.mxu0 %v1180
        %v1182 = vand.u32 %v314, 4294901760
        %1183 = vmatprep.subr.mxu0 %v1182
        %v1184 = vand.u32 %v313, 4294901760
        %1185 = vmatpush1.msra.mxu0 %v1184
        %v1186 = vand.u32 %v318, 4294901760
        %1187 = vmatprep.subr.mxu0 %v1186
        %v1188 = vand.u32 %v317, 4294901760
        %1189 = vmatpush1.msra.mxu0 %v1188
        %v1190 = vand.u32 %v322, 4294901760
        %1191 = vmatprep.subr.mxu0 %v1190
        %v1192 = vand.u32 %v321, 4294901760
        %1193 = vmatpush1.msra.mxu0 %v1192
        %v1194 = vand.u32 %v326, 4294901760
        %1195 = vmatprep.subr.mxu0 %v1194
        %v1196 = vand.u32 %v325, 4294901760
        %1197 = vmatpush1.msra.mxu0 %v1196
        %v1198 = vand.u32 %v200, 4294901760
        %v1199 = vsub.f32 %v200, %v1198
        %v1200 = vand.u32 %v1199, 4294901760
        %1201 = vmatprep.mubr.f32.mxu0 %v1200
        %v1202 = vand.u32 %v199, 4294901760
        %v1203 = vsub.f32 %v199, %v1202
        %v1204 = vand.u32 %v1203, 4294901760
        %1205 = vmatmul.mubr.f32.gmra.mrb[0].mxu0 %v1204
        %v1206 = vpop.f32.mrb[0].mxu0
        %v1207 = vadd.f32 %v1066, %v1206
        %v1208 = vpop.f32.mrb[0].mxu0
        %v1209 = vadd.f32 %v1068, %v1208
        %1210 = vdwg.mxu0
        %v1211 = vand.u32 %v202, 4294901760
        %v1212 = vsub.f32 %v202, %v1211
        %v1213 = vand.u32 %v1212, 4294901760
        %1214 = vmatprep.subr.mxu0 %v1213
        %v1215 = vand.u32 %v201, 4294901760
        %v1216 = vsub.f32 %v201, %v1215
        %v1217 = vand.u32 %v1216, 4294901760
        %1218 = vmatpush1.msra.mxu0 %v1217
        %v1219 = vand.u32 %v206, 4294901760
        %v1220 = vsub.f32 %v206, %v1219
        %v1221 = vand.u32 %v1220, 4294901760
        %1222 = vmatprep.subr.mxu0 %v1221
        %v1223 = vand.u32 %v205, 4294901760
        %v1224 = vsub.f32 %v205, %v1223
        %v1225 = vand.u32 %v1224, 4294901760
        %1226 = vmatpush1.msra.mxu0 %v1225
        %v1227 = vand.u32 %v210, 4294901760
        %v1228 = vsub.f32 %v210, %v1227
        %v1229 = vand.u32 %v1228, 4294901760
        %1230 = vmatprep.subr.mxu0 %v1229
        %v1231 = vand.u32 %v209, 4294901760
        %v1232 = vsub.f32 %v209, %v1231
        %v1233 = vand.u32 %v1232, 4294901760
        %1234 = vmatpush1.msra.mxu0 %v1233
        %v1235 = vand.u32 %v214, 4294901760
        %v1236 = vsub.f32 %v214, %v1235
        %v1237 = vand.u32 %v1236, 4294901760
        %1238 = vmatprep.subr.mxu0 %v1237
        %v1239 = vand.u32 %v213, 4294901760
        %v1240 = vsub.f32 %v213, %v1239
        %v1241 = vand.u32 %v1240, 4294901760
        %1242 = vmatpush1.msra.mxu0 %v1241
        %v1243 = vand.u32 %v218, 4294901760
        %v1244 = vsub.f32 %v218, %v1243
        %v1245 = vand.u32 %v1244, 4294901760
        %1246 = vmatprep.subr.mxu0 %v1245
        %v1247 = vand.u32 %v217, 4294901760
        %v1248 = vsub.f32 %v217, %v1247
        %v1249 = vand.u32 %v1248, 4294901760
        %1250 = vmatpush1.msra.mxu0 %v1249
        %v1251 = vand.u32 %v222, 4294901760
        %v1252 = vsub.f32 %v222, %v1251
        %v1253 = vand.u32 %v1252, 4294901760
        %1254 = vmatprep.subr.mxu0 %v1253
        %v1255 = vand.u32 %v221, 4294901760
        %v1256 = vsub.f32 %v221, %v1255
        %v1257 = vand.u32 %v1256, 4294901760
        %1258 = vmatpush1.msra.mxu0 %v1257
        %v1259 = vand.u32 %v226, 4294901760
        %v1260 = vsub.f32 %v226, %v1259
        %v1261 = vand.u32 %v1260, 4294901760
        %1262 = vmatprep.subr.mxu0 %v1261
        %v1263 = vand.u32 %v225, 4294901760
        %v1264 = vsub.f32 %v225, %v1263
        %v1265 = vand.u32 %v1264, 4294901760
        %1266 = vmatpush1.msra.mxu0 %v1265
        %v1267 = vand.u32 %v230, 4294901760
        %v1268 = vsub.f32 %v230, %v1267
        %v1269 = vand.u32 %v1268, 4294901760
        %1270 = vmatprep.subr.mxu0 %v1269
        %v1271 = vand.u32 %v229, 4294901760
        %v1272 = vsub.f32 %v229, %v1271
        %v1273 = vand.u32 %v1272, 4294901760
        %1274 = vmatpush1.msra.mxu0 %v1273
        %v1275 = vand.u32 %v234, 4294901760
        %v1276 = vsub.f32 %v234, %v1275
        %v1277 = vand.u32 %v1276, 4294901760
        %1278 = vmatprep.subr.mxu0 %v1277
        %v1279 = vand.u32 %v233, 4294901760
        %v1280 = vsub.f32 %v233, %v1279
        %v1281 = vand.u32 %v1280, 4294901760
        %1282 = vmatpush1.msra.mxu0 %v1281
        %v1283 = vand.u32 %v238, 4294901760
        %v1284 = vsub.f32 %v238, %v1283
        %v1285 = vand.u32 %v1284, 4294901760
        %1286 = vmatprep.subr.mxu0 %v1285
        %v1287 = vand.u32 %v237, 4294901760
        %v1288 = vsub.f32 %v237, %v1287
        %v1289 = vand.u32 %v1288, 4294901760
        %1290 = vmatpush1.msra.mxu0 %v1289
        %v1291 = vand.u32 %v242, 4294901760
        %v1292 = vsub.f32 %v242, %v1291
        %v1293 = vand.u32 %v1292, 4294901760
        %1294 = vmatprep.subr.mxu0 %v1293
        %v1295 = vand.u32 %v241, 4294901760
        %v1296 = vsub.f32 %v241, %v1295
        %v1297 = vand.u32 %v1296, 4294901760
        %1298 = vmatpush1.msra.mxu0 %v1297
        %v1299 = vand.u32 %v246, 4294901760
        %v1300 = vsub.f32 %v246, %v1299
        %v1301 = vand.u32 %v1300, 4294901760
        %1302 = vmatprep.subr.mxu0 %v1301
        %v1303 = vand.u32 %v245, 4294901760
        %v1304 = vsub.f32 %v245, %v1303
        %v1305 = vand.u32 %v1304, 4294901760
        %1306 = vmatpush1.msra.mxu0 %v1305
        %v1307 = vand.u32 %v250, 4294901760
        %v1308 = vsub.f32 %v250, %v1307
        %v1309 = vand.u32 %v1308, 4294901760
        %1310 = vmatprep.subr.mxu0 %v1309
        %v1311 = vand.u32 %v249, 4294901760
        %v1312 = vsub.f32 %v249, %v1311
        %v1313 = vand.u32 %v1312, 4294901760
        %1314 = vmatpush1.msra.mxu0 %v1313
        %v1315 = vand.u32 %v254, 4294901760
        %v1316 = vsub.f32 %v254, %v1315
        %v1317 = vand.u32 %v1316, 4294901760
        %1318 = vmatprep.subr.mxu0 %v1317
        %v1319 = vand.u32 %v253, 4294901760
        %v1320 = vsub.f32 %v253, %v1319
        %v1321 = vand.u32 %v1320, 4294901760
        %1322 = vmatpush1.msra.mxu0 %v1321
        %v1323 = vand.u32 %v258, 4294901760
        %v1324 = vsub.f32 %v258, %v1323
        %v1325 = vand.u32 %v1324, 4294901760
        %1326 = vmatprep.subr.mxu0 %v1325
        %v1327 = vand.u32 %v257, 4294901760
        %v1328 = vsub.f32 %v257, %v1327
        %v1329 = vand.u32 %v1328, 4294901760
        %1330 = vmatpush1.msra.mxu0 %v1329
        %v1331 = vand.u32 %v262, 4294901760
        %v1332 = vsub.f32 %v262, %v1331
        %v1333 = vand.u32 %v1332, 4294901760
        %1334 = vmatprep.subr.mxu0 %v1333
        %v1335 = vand.u32 %v261, 4294901760
        %v1336 = vsub.f32 %v261, %v1335
        %v1337 = vand.u32 %v1336, 4294901760
        %1338 = vmatpush1.msra.mxu0 %v1337
        %v1339 = vand.u32 %v266, 4294901760
        %v1340 = vsub.f32 %v266, %v1339
        %v1341 = vand.u32 %v1340, 4294901760
        %1342 = vmatprep.subr.mxu0 %v1341
        %v1343 = vand.u32 %v265, 4294901760
        %v1344 = vsub.f32 %v265, %v1343
        %v1345 = vand.u32 %v1344, 4294901760
        %1346 = vmatpush1.msra.mxu0 %v1345
        %v1347 = vand.u32 %v270, 4294901760
        %v1348 = vsub.f32 %v270, %v1347
        %v1349 = vand.u32 %v1348, 4294901760
        %1350 = vmatprep.subr.mxu0 %v1349
        %v1351 = vand.u32 %v269, 4294901760
        %v1352 = vsub.f32 %v269, %v1351
        %v1353 = vand.u32 %v1352, 4294901760
        %1354 = vmatpush1.msra.mxu0 %v1353
        %v1355 = vand.u32 %v274, 4294901760
        %v1356 = vsub.f32 %v274, %v1355
        %v1357 = vand.u32 %v1356, 4294901760
        %1358 = vmatprep.subr.mxu0 %v1357
        %v1359 = vand.u32 %v273, 4294901760
        %v1360 = vsub.f32 %v273, %v1359
        %v1361 = vand.u32 %v1360, 4294901760
        %1362 = vmatpush1.msra.mxu0 %v1361
        %v1363 = vand.u32 %v278, 4294901760
        %v1364 = vsub.f32 %v278, %v1363
        %v1365 = vand.u32 %v1364, 4294901760
        %1366 = vmatprep.subr.mxu0 %v1365
        %v1367 = vand.u32 %v277, 4294901760
        %v1368 = vsub.f32 %v277, %v1367
        %v1369 = vand.u32 %v1368, 4294901760
        %1370 = vmatpush1.msra.mxu0 %v1369
        %v1371 = vand.u32 %v282, 4294901760
        %v1372 = vsub.f32 %v282, %v1371
        %v1373 = vand.u32 %v1372, 4294901760
        %1374 = vmatprep.subr.mxu0 %v1373
        %v1375 = vand.u32 %v281, 4294901760
        %v1376 = vsub.f32 %v281, %v1375
        %v1377 = vand.u32 %v1376, 4294901760
        %1378 = vmatpush1.msra.mxu0 %v1377
        %v1379 = vand.u32 %v286, 4294901760
        %v1380 = vsub.f32 %v286, %v1379
        %v1381 = vand.u32 %v1380, 4294901760
        %1382 = vmatprep.subr.mxu0 %v1381
        %v1383 = vand.u32 %v285, 4294901760
        %v1384 = vsub.f32 %v285, %v1383
        %v1385 = vand.u32 %v1384, 4294901760
        %1386 = vmatpush1.msra.mxu0 %v1385
        %v1387 = vand.u32 %v290, 4294901760
        %v1388 = vsub.f32 %v290, %v1387
        %v1389 = vand.u32 %v1388, 4294901760
        %1390 = vmatprep.subr.mxu0 %v1389
        %v1391 = vand.u32 %v289, 4294901760
        %v1392 = vsub.f32 %v289, %v1391
        %v1393 = vand.u32 %v1392, 4294901760
        %1394 = vmatpush1.msra.mxu0 %v1393
        %v1395 = vand.u32 %v294, 4294901760
        %v1396 = vsub.f32 %v294, %v1395
        %v1397 = vand.u32 %v1396, 4294901760
        %1398 = vmatprep.subr.mxu0 %v1397
        %v1399 = vand.u32 %v293, 4294901760
        %v1400 = vsub.f32 %v293, %v1399
        %v1401 = vand.u32 %v1400, 4294901760
        %1402 = vmatpush1.msra.mxu0 %v1401
        %v1403 = vand.u32 %v298, 4294901760
        %v1404 = vsub.f32 %v298, %v1403
        %v1405 = vand.u32 %v1404, 4294901760
        %1406 = vmatprep.subr.mxu0 %v1405
        %v1407 = vand.u32 %v297, 4294901760
        %v1408 = vsub.f32 %v297, %v1407
        %v1409 = vand.u32 %v1408, 4294901760
        %1410 = vmatpush1.msra.mxu0 %v1409
        %v1411 = vand.u32 %v302, 4294901760
        %v1412 = vsub.f32 %v302, %v1411
        %v1413 = vand.u32 %v1412, 4294901760
        %1414 = vmatprep.subr.mxu0 %v1413
        %v1415 = vand.u32 %v301, 4294901760
        %v1416 = vsub.f32 %v301, %v1415
        %v1417 = vand.u32 %v1416, 4294901760
        %1418 = vmatpush1.msra.mxu0 %v1417
        %v1419 = vand.u32 %v306, 4294901760
        %v1420 = vsub.f32 %v306, %v1419
        %v1421 = vand.u32 %v1420, 4294901760
        %1422 = vmatprep.subr.mxu0 %v1421
        %v1423 = vand.u32 %v305, 4294901760
        %v1424 = vsub.f32 %v305, %v1423
        %v1425 = vand.u32 %v1424, 4294901760
        %1426 = vmatpush1.msra.mxu0 %v1425
        %v1427 = vand.u32 %v310, 4294901760
        %v1428 = vsub.f32 %v310, %v1427
        %v1429 = vand.u32 %v1428, 4294901760
        %1430 = vmatprep.subr.mxu0 %v1429
        %v1431 = vand.u32 %v309, 4294901760
        %v1432 = vsub.f32 %v309, %v1431
        %v1433 = vand.u32 %v1432, 4294901760
        %1434 = vmatpush1.msra.mxu0 %v1433
        %v1435 = vand.u32 %v314, 4294901760
        %v1436 = vsub.f32 %v314, %v1435
        %v1437 = vand.u32 %v1436, 4294901760
        %1438 = vmatprep.subr.mxu0 %v1437
        %v1439 = vand.u32 %v313, 4294901760
        %v1440 = vsub.f32 %v313, %v1439
        %v1441 = vand.u32 %v1440, 4294901760
        %1442 = vmatpush1.msra.mxu0 %v1441
        %v1443 = vand.u32 %v318, 4294901760
        %v1444 = vsub.f32 %v318, %v1443
        %v1445 = vand.u32 %v1444, 4294901760
        %1446 = vmatprep.subr.mxu0 %v1445
        %v1447 = vand.u32 %v317, 4294901760
        %v1448 = vsub.f32 %v317, %v1447
        %v1449 = vand.u32 %v1448, 4294901760
        %1450 = vmatpush1.msra.mxu0 %v1449
        %v1451 = vand.u32 %v322, 4294901760
        %v1452 = vsub.f32 %v322, %v1451
        %v1453 = vand.u32 %v1452, 4294901760
        %1454 = vmatprep.subr.mxu0 %v1453
        %v1455 = vand.u32 %v321, 4294901760
        %v1456 = vsub.f32 %v321, %v1455
        %v1457 = vand.u32 %v1456, 4294901760
        %1458 = vmatpush1.msra.mxu0 %v1457
        %v1459 = vand.u32 %v326, 4294901760
        %v1460 = vsub.f32 %v326, %v1459
        %v1461 = vand.u32 %v1460, 4294901760
        %1462 = vmatprep.subr.mxu0 %v1461
        %v1463 = vand.u32 %v325, 4294901760
        %v1464 = vsub.f32 %v325, %v1463
        %v1465 = vand.u32 %v1464, 4294901760
        %1466 = vmatpush1.msra.mxu0 %v1465
        %v1467 = vand.u32 %v200, 4294901760
        %1468 = vmatprep.mubr.f32.mxu0 %v1467
        %v1469 = vand.u32 %v199, 4294901760
        %1470 = vmatmul.mubr.f32.gmra.mrb[0].mxu0 %v1469
        %v1471 = vpop.f32.mrb[0].mxu0
        %v1472 = vadd.f32 %v1207, %v1471
        %v1473 = vpop.f32.mrb[0].mxu0
        %v1474 = vadd.f32 %v1209, %v1473
        %1475 = vdwg.mxu0
        %v1476 = vand.u32 %v202, 4294901760
        %1477 = vmatprep.subr.mxu0 %v1476
        %v1478 = vand.u32 %v201, 4294901760
        %1479 = vmatpush1.msra.mxu0 %v1478
        %v1480 = vand.u32 %v206, 4294901760
        %1481 = vmatprep.subr.mxu0 %v1480
        %v1482 = vand.u32 %v205, 4294901760
        %1483 = vmatpush1.msra.mxu0 %v1482
        %v1484 = vand.u32 %v210, 4294901760
        %1485 = vmatprep.subr.mxu0 %v1484
        %v1486 = vand.u32 %v209, 4294901760
        %1487 = vmatpush1.msra.mxu0 %v1486
        %v1488 = vand.u32 %v214, 4294901760
        %1489 = vmatprep.subr.mxu0 %v1488
        %v1490 = vand.u32 %v213, 4294901760
        %1491 = vmatpush1.msra.mxu0 %v1490
        %v1492 = vand.u32 %v218, 4294901760
        %1493 = vmatprep.subr.mxu0 %v1492
        %v1494 = vand.u32 %v217, 4294901760
        %1495 = vmatpush1.msra.mxu0 %v1494
        %v1496 = vand.u32 %v222, 4294901760
        %1497 = vmatprep.subr.mxu0 %v1496
        %v1498 = vand.u32 %v221, 4294901760
        %1499 = vmatpush1.msra.mxu0 %v1498
        %v1500 = vand.u32 %v226, 4294901760
        %1501 = vmatprep.subr.mxu0 %v1500
        %v1502 = vand.u32 %v225, 4294901760
        %1503 = vmatpush1.msra.mxu0 %v1502
        %v1504 = vand.u32 %v230, 4294901760
        %1505 = vmatprep.subr.mxu0 %v1504
        %v1506 = vand.u32 %v229, 4294901760
        %1507 = vmatpush1.msra.mxu0 %v1506
        %v1508 = vand.u32 %v234, 4294901760
        %1509 = vmatprep.subr.mxu0 %v1508
        %v1510 = vand.u32 %v233, 4294901760
        %1511 = vmatpush1.msra.mxu0 %v1510
        %v1512 = vand.u32 %v238, 4294901760
        %1513 = vmatprep.subr.mxu0 %v1512
        %v1514 = vand.u32 %v237, 4294901760
        %1515 = vmatpush1.msra.mxu0 %v1514
        %v1516 = vand.u32 %v242, 4294901760
        %1517 = vmatprep.subr.mxu0 %v1516
        %v1518 = vand.u32 %v241, 4294901760
        %1519 = vmatpush1.msra.mxu0 %v1518
        %v1520 = vand.u32 %v246, 4294901760
        %1521 = vmatprep.subr.mxu0 %v1520
        %v1522 = vand.u32 %v245, 4294901760
        %1523 = vmatpush1.msra.mxu0 %v1522
        %v1524 = vand.u32 %v250, 4294901760
        %1525 = vmatprep.subr.mxu0 %v1524
        %v1526 = vand.u32 %v249, 4294901760
        %1527 = vmatpush1.msra.mxu0 %v1526
        %v1528 = vand.u32 %v254, 4294901760
        %1529 = vmatprep.subr.mxu0 %v1528
        %v1530 = vand.u32 %v253, 4294901760
        %1531 = vmatpush1.msra.mxu0 %v1530
        %v1532 = vand.u32 %v258, 4294901760
        %1533 = vmatprep.subr.mxu0 %v1532
        %v1534 = vand.u32 %v257, 4294901760
        %1535 = vmatpush1.msra.mxu0 %v1534
        %v1536 = vand.u32 %v262, 4294901760
        %1537 = vmatprep.subr.mxu0 %v1536
        %v1538 = vand.u32 %v261, 4294901760
        %1539 = vmatpush1.msra.mxu0 %v1538
        %v1540 = vand.u32 %v266, 4294901760
        %1541 = vmatprep.subr.mxu0 %v1540
        %v1542 = vand.u32 %v265, 4294901760
        %1543 = vmatpush1.msra.mxu0 %v1542
        %v1544 = vand.u32 %v270, 4294901760
        %1545 = vmatprep.subr.mxu0 %v1544
        %v1546 = vand.u32 %v269, 4294901760
        %1547 = vmatpush1.msra.mxu0 %v1546
        %v1548 = vand.u32 %v274, 4294901760
        %1549 = vmatprep.subr.mxu0 %v1548
        %v1550 = vand.u32 %v273, 4294901760
        %1551 = vmatpush1.msra.mxu0 %v1550
        %v1552 = vand.u32 %v278, 4294901760
        %1553 = vmatprep.subr.mxu0 %v1552
        %v1554 = vand.u32 %v277, 4294901760
        %1555 = vmatpush1.msra.mxu0 %v1554
        %v1556 = vand.u32 %v282, 4294901760
        %1557 = vmatprep.subr.mxu0 %v1556
        %v1558 = vand.u32 %v281, 4294901760
        %1559 = vmatpush1.msra.mxu0 %v1558
        %v1560 = vand.u32 %v286, 4294901760
        %1561 = vmatprep.subr.mxu0 %v1560
        %v1562 = vand.u32 %v285, 4294901760
        %1563 = vmatpush1.msra.mxu0 %v1562
        %v1564 = vand.u32 %v290, 4294901760
        %1565 = vmatprep.subr.mxu0 %v1564
        %v1566 = vand.u32 %v289, 4294901760
        %1567 = vmatpush1.msra.mxu0 %v1566
        %v1568 = vand.u32 %v294, 4294901760
        %1569 = vmatprep.subr.mxu0 %v1568
        %v1570 = vand.u32 %v293, 4294901760
        %1571 = vmatpush1.msra.mxu0 %v1570
        %v1572 = vand.u32 %v298, 4294901760
        %1573 = vmatprep.subr.mxu0 %v1572
        %v1574 = vand.u32 %v297, 4294901760
        %1575 = vmatpush1.msra.mxu0 %v1574
        %v1576 = vand.u32 %v302, 4294901760
        %1577 = vmatprep.subr.mxu0 %v1576
        %v1578 = vand.u32 %v301, 4294901760
        %1579 = vmatpush1.msra.mxu0 %v1578
        %v1580 = vand.u32 %v306, 4294901760
        %1581 = vmatprep.subr.mxu0 %v1580
        %v1582 = vand.u32 %v305, 4294901760
        %1583 = vmatpush1.msra.mxu0 %v1582
        %v1584 = vand.u32 %v310, 4294901760
        %1585 = vmatprep.subr.mxu0 %v1584
        %v1586 = vand.u32 %v309, 4294901760
        %1587 = vmatpush1.msra.mxu0 %v1586
        %v1588 = vand.u32 %v314, 4294901760
        %1589 = vmatprep.subr.mxu0 %v1588
        %v1590 = vand.u32 %v313, 4294901760
        %1591 = vmatpush1.msra.mxu0 %v1590
        %v1592 = vand.u32 %v318, 4294901760
        %1593 = vmatprep.subr.mxu0 %v1592
        %v1594 = vand.u32 %v317, 4294901760
        %1595 = vmatpush1.msra.mxu0 %v1594
        %v1596 = vand.u32 %v322, 4294901760
        %1597 = vmatprep.subr.mxu0 %v1596
        %v1598 = vand.u32 %v321, 4294901760
        %1599 = vmatpush1.msra.mxu0 %v1598
        %v1600 = vand.u32 %v326, 4294901760
        %1601 = vmatprep.subr.mxu0 %v1600
        %v1602 = vand.u32 %v325, 4294901760
        %1603 = vmatpush1.msra.mxu0 %v1602
        %v1604 = vand.u32 %v200, 4294901760
        %1605 = vmatprep.mubr.f32.mxu0 %v1604
        %v1606 = vand.u32 %v199, 4294901760
        %1607 = vmatmul.mubr.f32.gmra.mrb[0].mxu0 %v1606
        %v1608 = vpop.f32.mrb[0].mxu0
        %v1609 = vadd.f32 %v1472, %v1608
        %v1610 = vpop.f32.mrb[0].mxu0
        %v1611 = vadd.f32 %v1474, %v1610
        %1612 = vdwg.mxu0
        %v1613 = vand.u32 %v204, 4294901760
        %1614 = vmatprep.subr.mxu0 %v1613
        %v1615 = vand.u32 %v203, 4294901760
        %1616 = vmatpush1.msra.mxu0 %v1615
        %v1617 = vand.u32 %v208, 4294901760
        %1618 = vmatprep.subr.mxu0 %v1617
        %v1619 = vand.u32 %v207, 4294901760
        %1620 = vmatpush1.msra.mxu0 %v1619
        %v1621 = vand.u32 %v212, 4294901760
        %1622 = vmatprep.subr.mxu0 %v1621
        %v1623 = vand.u32 %v211, 4294901760
        %1624 = vmatpush1.msra.mxu0 %v1623
        %v1625 = vand.u32 %v216, 4294901760
        %1626 = vmatprep.subr.mxu0 %v1625
        %v1627 = vand.u32 %v215, 4294901760
        %1628 = vmatpush1.msra.mxu0 %v1627
        %v1629 = vand.u32 %v220, 4294901760
        %1630 = vmatprep.subr.mxu0 %v1629
        %v1631 = vand.u32 %v219, 4294901760
        %1632 = vmatpush1.msra.mxu0 %v1631
        %v1633 = vand.u32 %v224, 4294901760
        %1634 = vmatprep.subr.mxu0 %v1633
        %v1635 = vand.u32 %v223, 4294901760
        %1636 = vmatpush1.msra.mxu0 %v1635
        %v1637 = vand.u32 %v228, 4294901760
        %1638 = vmatprep.subr.mxu0 %v1637
        %v1639 = vand.u32 %v227, 4294901760
        %1640 = vmatpush1.msra.mxu0 %v1639
        %v1641 = vand.u32 %v232, 4294901760
        %1642 = vmatprep.subr.mxu0 %v1641
        %v1643 = vand.u32 %v231, 4294901760
        %1644 = vmatpush1.msra.mxu0 %v1643
        %v1645 = vand.u32 %v236, 4294901760
        %1646 = vmatprep.subr.mxu0 %v1645
        %v1647 = vand.u32 %v235, 4294901760
        %1648 = vmatpush1.msra.mxu0 %v1647
        %v1649 = vand.u32 %v240, 4294901760
        %1650 = vmatprep.subr.mxu0 %v1649
        %v1651 = vand.u32 %v239, 4294901760
        %1652 = vmatpush1.msra.mxu0 %v1651
        %v1653 = vand.u32 %v244, 4294901760
        %1654 = vmatprep.subr.mxu0 %v1653
        %v1655 = vand.u32 %v243, 4294901760
        %1656 = vmatpush1.msra.mxu0 %v1655
        %v1657 = vand.u32 %v248, 4294901760
        %1658 = vmatprep.subr.mxu0 %v1657
        %v1659 = vand.u32 %v247, 4294901760
        %1660 = vmatpush1.msra.mxu0 %v1659
        %v1661 = vand.u32 %v252, 4294901760
        %1662 = vmatprep.subr.mxu0 %v1661
        %v1663 = vand.u32 %v251, 4294901760
        %1664 = vmatpush1.msra.mxu0 %v1663
        %v1665 = vand.u32 %v256, 4294901760
        %1666 = vmatprep.subr.mxu0 %v1665
        %v1667 = vand.u32 %v255, 4294901760
        %1668 = vmatpush1.msra.mxu0 %v1667
        %v1669 = vand.u32 %v260, 4294901760
        %1670 = vmatprep.subr.mxu0 %v1669
        %v1671 = vand.u32 %v259, 4294901760
        %1672 = vmatpush1.msra.mxu0 %v1671
        %v1673 = vand.u32 %v264, 4294901760
        %1674 = vmatprep.subr.mxu0 %v1673
        %v1675 = vand.u32 %v263, 4294901760
        %1676 = vmatpush1.msra.mxu0 %v1675
        %v1677 = vand.u32 %v268, 4294901760
        %1678 = vmatprep.subr.mxu0 %v1677
        %v1679 = vand.u32 %v267, 4294901760
        %1680 = vmatpush1.msra.mxu0 %v1679
        %v1681 = vand.u32 %v272, 4294901760
        %1682 = vmatprep.subr.mxu0 %v1681
        %v1683 = vand.u32 %v271, 4294901760
        %1684 = vmatpush1.msra.mxu0 %v1683
        %v1685 = vand.u32 %v276, 4294901760
        %1686 = vmatprep.subr.mxu0 %v1685
        %v1687 = vand.u32 %v275, 4294901760
        %1688 = vmatpush1.msra.mxu0 %v1687
        %v1689 = vand.u32 %v280, 4294901760
        %1690 = vmatprep.subr.mxu0 %v1689
        %v1691 = vand.u32 %v279, 4294901760
        %1692 = vmatpush1.msra.mxu0 %v1691
        %v1693 = vand.u32 %v284, 4294901760
        %1694 = vmatprep.subr.mxu0 %v1693
        %v1695 = vand.u32 %v283, 4294901760
        %1696 = vmatpush1.msra.mxu0 %v1695
        %v1697 = vand.u32 %v288, 4294901760
        %1698 = vmatprep.subr.mxu0 %v1697
        %v1699 = vand.u32 %v287, 4294901760
        %1700 = vmatpush1.msra.mxu0 %v1699
        %v1701 = vand.u32 %v292, 4294901760
        %1702 = vmatprep.subr.mxu0 %v1701
        %v1703 = vand.u32 %v291, 4294901760
        %1704 = vmatpush1.msra.mxu0 %v1703
        %v1705 = vand.u32 %v296, 4294901760
        %1706 = vmatprep.subr.mxu0 %v1705
        %v1707 = vand.u32 %v295, 4294901760
        %1708 = vmatpush1.msra.mxu0 %v1707
        %v1709 = vand.u32 %v300, 4294901760
        %1710 = vmatprep.subr.mxu0 %v1709
        %v1711 = vand.u32 %v299, 4294901760
        %1712 = vmatpush1.msra.mxu0 %v1711
        %v1713 = vand.u32 %v304, 4294901760
        %1714 = vmatprep.subr.mxu0 %v1713
        %v1715 = vand.u32 %v303, 4294901760
        %1716 = vmatpush1.msra.mxu0 %v1715
        %v1717 = vand.u32 %v308, 4294901760
        %1718 = vmatprep.subr.mxu0 %v1717
        %v1719 = vand.u32 %v307, 4294901760
        %1720 = vmatpush1.msra.mxu0 %v1719
        %v1721 = vand.u32 %v312, 4294901760
        %1722 = vmatprep.subr.mxu0 %v1721
        %v1723 = vand.u32 %v311, 4294901760
        %1724 = vmatpush1.msra.mxu0 %v1723
        %v1725 = vand.u32 %v316, 4294901760
        %1726 = vmatprep.subr.mxu0 %v1725
        %v1727 = vand.u32 %v315, 4294901760
        %1728 = vmatpush1.msra.mxu0 %v1727
        %v1729 = vand.u32 %v320, 4294901760
        %1730 = vmatprep.subr.mxu0 %v1729
        %v1731 = vand.u32 %v319, 4294901760
        %1732 = vmatpush1.msra.mxu0 %v1731
        %v1733 = vand.u32 %v324, 4294901760
        %1734 = vmatprep.subr.mxu0 %v1733
        %v1735 = vand.u32 %v323, 4294901760
        %1736 = vmatpush1.msra.mxu0 %v1735
        %v1737 = vand.u32 %v328, 4294901760
        %1738 = vmatprep.subr.mxu0 %v1737
        %v1739 = vand.u32 %v327, 4294901760
        %1740 = vmatpush1.msra.mxu0 %v1739
        %v1741 = vand.u32 %v200, 4294901760
        %v1742 = vsub.f32 %v200, %v1741
        %v1743 = vand.u32 %v1742, 4294901760
        %v1744 = vsub.f32 %v1742, %v1743
        %v1745 = vand.u32 %v1744, 4294901760
        %1746 = vmatprep.mubr.f32.mxu0 %v1745
        %v1747 = vand.u32 %v199, 4294901760
        %v1748 = vsub.f32 %v199, %v1747
        %v1749 = vand.u32 %v1748, 4294901760
        %v1750 = vsub.f32 %v1748, %v1749
        %v1751 = vand.u32 %v1750, 4294901760
        %1752 = vmatmul.mubr.f32.gmra.mrb[0].mxu0 %v1751
        %v1753 = vpop.f32.mrb[0].mxu0
        %v1754 = vadd.f32 0.0, %v1753
        %v1755 = vpop.f32.mrb[0].mxu0
        %v1756 = vadd.f32 0.0, %v1755
        %1757 = vdwg.mxu0
        %v1758 = vand.u32 %v204, 4294901760
        %v1759 = vsub.f32 %v204, %v1758
        %v1760 = vand.u32 %v1759, 4294901760
        %v1761 = vsub.f32 %v1759, %v1760
        %v1762 = vand.u32 %v1761, 4294901760
        %1763 = vmatprep.subr.mxu0 %v1762
        %v1764 = vand.u32 %v203, 4294901760
        %v1765 = vsub.f32 %v203, %v1764
        %v1766 = vand.u32 %v1765, 4294901760
        %v1767 = vsub.f32 %v1765, %v1766
        %v1768 = vand.u32 %v1767, 4294901760
        %1769 = vmatpush1.msra.mxu0 %v1768
        %v1770 = vand.u32 %v208, 4294901760
        %v1771 = vsub.f32 %v208, %v1770
        %v1772 = vand.u32 %v1771, 4294901760
        %v1773 = vsub.f32 %v1771, %v1772
        %v1774 = vand.u32 %v1773, 4294901760
        %1775 = vmatprep.subr.mxu0 %v1774
        %v1776 = vand.u32 %v207, 4294901760
        %v1777 = vsub.f32 %v207, %v1776
        %v1778 = vand.u32 %v1777, 4294901760
        %v1779 = vsub.f32 %v1777, %v1778
        %v1780 = vand.u32 %v1779, 4294901760
        %1781 = vmatpush1.msra.mxu0 %v1780
        %v1782 = vand.u32 %v212, 4294901760
        %v1783 = vsub.f32 %v212, %v1782
        %v1784 = vand.u32 %v1783, 4294901760
        %v1785 = vsub.f32 %v1783, %v1784
        %v1786 = vand.u32 %v1785, 4294901760
        %1787 = vmatprep.subr.mxu0 %v1786
        %v1788 = vand.u32 %v211, 4294901760
        %v1789 = vsub.f32 %v211, %v1788
        %v1790 = vand.u32 %v1789, 4294901760
        %v1791 = vsub.f32 %v1789, %v1790
        %v1792 = vand.u32 %v1791, 4294901760
        %1793 = vmatpush1.msra.mxu0 %v1792
        %v1794 = vand.u32 %v216, 4294901760
        %v1795 = vsub.f32 %v216, %v1794
        %v1796 = vand.u32 %v1795, 4294901760
        %v1797 = vsub.f32 %v1795, %v1796
        %v1798 = vand.u32 %v1797, 4294901760
        %1799 = vmatprep.subr.mxu0 %v1798
        %v1800 = vand.u32 %v215, 4294901760
        %v1801 = vsub.f32 %v215, %v1800
        %v1802 = vand.u32 %v1801, 4294901760
        %v1803 = vsub.f32 %v1801, %v1802
        %v1804 = vand.u32 %v1803, 4294901760
        %1805 = vmatpush1.msra.mxu0 %v1804
        %v1806 = vand.u32 %v220, 4294901760
        %v1807 = vsub.f32 %v220, %v1806
        %v1808 = vand.u32 %v1807, 4294901760
        %v1809 = vsub.f32 %v1807, %v1808
        %v1810 = vand.u32 %v1809, 4294901760
        %1811 = vmatprep.subr.mxu0 %v1810
        %v1812 = vand.u32 %v219, 4294901760
        %v1813 = vsub.f32 %v219, %v1812
        %v1814 = vand.u32 %v1813, 4294901760
        %v1815 = vsub.f32 %v1813, %v1814
        %v1816 = vand.u32 %v1815, 4294901760
        %1817 = vmatpush1.msra.mxu0 %v1816
        %v1818 = vand.u32 %v224, 4294901760
        %v1819 = vsub.f32 %v224, %v1818
        %v1820 = vand.u32 %v1819, 4294901760
        %v1821 = vsub.f32 %v1819, %v1820
        %v1822 = vand.u32 %v1821, 4294901760
        %1823 = vmatprep.subr.mxu0 %v1822
        %v1824 = vand.u32 %v223, 4294901760
        %v1825 = vsub.f32 %v223, %v1824
        %v1826 = vand.u32 %v1825, 4294901760
        %v1827 = vsub.f32 %v1825, %v1826
        %v1828 = vand.u32 %v1827, 4294901760
        %1829 = vmatpush1.msra.mxu0 %v1828
        %v1830 = vand.u32 %v228, 4294901760
        %v1831 = vsub.f32 %v228, %v1830
        %v1832 = vand.u32 %v1831, 4294901760
        %v1833 = vsub.f32 %v1831, %v1832
        %v1834 = vand.u32 %v1833, 4294901760
        %1835 = vmatprep.subr.mxu0 %v1834
        %v1836 = vand.u32 %v227, 4294901760
        %v1837 = vsub.f32 %v227, %v1836
        %v1838 = vand.u32 %v1837, 4294901760
        %v1839 = vsub.f32 %v1837, %v1838
        %v1840 = vand.u32 %v1839, 4294901760
        %1841 = vmatpush1.msra.mxu0 %v1840
        %v1842 = vand.u32 %v232, 4294901760
        %v1843 = vsub.f32 %v232, %v1842
        %v1844 = vand.u32 %v1843, 4294901760
        %v1845 = vsub.f32 %v1843, %v1844
        %v1846 = vand.u32 %v1845, 4294901760
        %1847 = vmatprep.subr.mxu0 %v1846
        %v1848 = vand.u32 %v231, 4294901760
        %v1849 = vsub.f32 %v231, %v1848
        %v1850 = vand.u32 %v1849, 4294901760
        %v1851 = vsub.f32 %v1849, %v1850
        %v1852 = vand.u32 %v1851, 4294901760
        %1853 = vmatpush1.msra.mxu0 %v1852
        %v1854 = vand.u32 %v236, 4294901760
        %v1855 = vsub.f32 %v236, %v1854
        %v1856 = vand.u32 %v1855, 4294901760
        %v1857 = vsub.f32 %v1855, %v1856
        %v1858 = vand.u32 %v1857, 4294901760
        %1859 = vmatprep.subr.mxu0 %v1858
        %v1860 = vand.u32 %v235, 4294901760
        %v1861 = vsub.f32 %v235, %v1860
        %v1862 = vand.u32 %v1861, 4294901760
        %v1863 = vsub.f32 %v1861, %v1862
        %v1864 = vand.u32 %v1863, 4294901760
        %1865 = vmatpush1.msra.mxu0 %v1864
        %v1866 = vand.u32 %v240, 4294901760
        %v1867 = vsub.f32 %v240, %v1866
        %v1868 = vand.u32 %v1867, 4294901760
        %v1869 = vsub.f32 %v1867, %v1868
        %v1870 = vand.u32 %v1869, 4294901760
        %1871 = vmatprep.subr.mxu0 %v1870
        %v1872 = vand.u32 %v239, 4294901760
        %v1873 = vsub.f32 %v239, %v1872
        %v1874 = vand.u32 %v1873, 4294901760
        %v1875 = vsub.f32 %v1873, %v1874
        %v1876 = vand.u32 %v1875, 4294901760
        %1877 = vmatpush1.msra.mxu0 %v1876
        %v1878 = vand.u32 %v244, 4294901760
        %v1879 = vsub.f32 %v244, %v1878
        %v1880 = vand.u32 %v1879, 4294901760
        %v1881 = vsub.f32 %v1879, %v1880
        %v1882 = vand.u32 %v1881, 4294901760
        %1883 = vmatprep.subr.mxu0 %v1882
        %v1884 = vand.u32 %v243, 4294901760
        %v1885 = vsub.f32 %v243, %v1884
        %v1886 = vand.u32 %v1885, 4294901760
        %v1887 = vsub.f32 %v1885, %v1886
        %v1888 = vand.u32 %v1887, 4294901760
        %1889 = vmatpush1.msra.mxu0 %v1888
        %v1890 = vand.u32 %v248, 4294901760
        %v1891 = vsub.f32 %v248, %v1890
        %v1892 = vand.u32 %v1891, 4294901760
        %v1893 = vsub.f32 %v1891, %v1892
        %v1894 = vand.u32 %v1893, 4294901760
        %1895 = vmatprep.subr.mxu0 %v1894
        %v1896 = vand.u32 %v247, 4294901760
        %v1897 = vsub.f32 %v247, %v1896
        %v1898 = vand.u32 %v1897, 4294901760
        %v1899 = vsub.f32 %v1897, %v1898
        %v1900 = vand.u32 %v1899, 4294901760
        %1901 = vmatpush1.msra.mxu0 %v1900
        %v1902 = vand.u32 %v252, 4294901760
        %v1903 = vsub.f32 %v252, %v1902
        %v1904 = vand.u32 %v1903, 4294901760
        %v1905 = vsub.f32 %v1903, %v1904
        %v1906 = vand.u32 %v1905, 4294901760
        %1907 = vmatprep.subr.mxu0 %v1906
        %v1908 = vand.u32 %v251, 4294901760
        %v1909 = vsub.f32 %v251, %v1908
        %v1910 = vand.u32 %v1909, 4294901760
        %v1911 = vsub.f32 %v1909, %v1910
        %v1912 = vand.u32 %v1911, 4294901760
        %1913 = vmatpush1.msra.mxu0 %v1912
        %v1914 = vand.u32 %v256, 4294901760
        %v1915 = vsub.f32 %v256, %v1914
        %v1916 = vand.u32 %v1915, 4294901760
        %v1917 = vsub.f32 %v1915, %v1916
        %v1918 = vand.u32 %v1917, 4294901760
        %1919 = vmatprep.subr.mxu0 %v1918
        %v1920 = vand.u32 %v255, 4294901760
        %v1921 = vsub.f32 %v255, %v1920
        %v1922 = vand.u32 %v1921, 4294901760
        %v1923 = vsub.f32 %v1921, %v1922
        %v1924 = vand.u32 %v1923, 4294901760
        %1925 = vmatpush1.msra.mxu0 %v1924
        %v1926 = vand.u32 %v260, 4294901760
        %v1927 = vsub.f32 %v260, %v1926
        %v1928 = vand.u32 %v1927, 4294901760
        %v1929 = vsub.f32 %v1927, %v1928
        %v1930 = vand.u32 %v1929, 4294901760
        %1931 = vmatprep.subr.mxu0 %v1930
        %v1932 = vand.u32 %v259, 4294901760
        %v1933 = vsub.f32 %v259, %v1932
        %v1934 = vand.u32 %v1933, 4294901760
        %v1935 = vsub.f32 %v1933, %v1934
        %v1936 = vand.u32 %v1935, 4294901760
        %1937 = vmatpush1.msra.mxu0 %v1936
        %v1938 = vand.u32 %v264, 4294901760
        %v1939 = vsub.f32 %v264, %v1938
        %v1940 = vand.u32 %v1939, 4294901760
        %v1941 = vsub.f32 %v1939, %v1940
        %v1942 = vand.u32 %v1941, 4294901760
        %1943 = vmatprep.subr.mxu0 %v1942
        %v1944 = vand.u32 %v263, 4294901760
        %v1945 = vsub.f32 %v263, %v1944
        %v1946 = vand.u32 %v1945, 4294901760
        %v1947 = vsub.f32 %v1945, %v1946
        %v1948 = vand.u32 %v1947, 4294901760
        %1949 = vmatpush1.msra.mxu0 %v1948
        %v1950 = vand.u32 %v268, 4294901760
        %v1951 = vsub.f32 %v268, %v1950
        %v1952 = vand.u32 %v1951, 4294901760
        %v1953 = vsub.f32 %v1951, %v1952
        %v1954 = vand.u32 %v1953, 4294901760
        %1955 = vmatprep.subr.mxu0 %v1954
        %v1956 = vand.u32 %v267, 4294901760
        %v1957 = vsub.f32 %v267, %v1956
        %v1958 = vand.u32 %v1957, 4294901760
        %v1959 = vsub.f32 %v1957, %v1958
        %v1960 = vand.u32 %v1959, 4294901760
        %1961 = vmatpush1.msra.mxu0 %v1960
        %v1962 = vand.u32 %v272, 4294901760
        %v1963 = vsub.f32 %v272, %v1962
        %v1964 = vand.u32 %v1963, 4294901760
        %v1965 = vsub.f32 %v1963, %v1964
        %v1966 = vand.u32 %v1965, 4294901760
        %1967 = vmatprep.subr.mxu0 %v1966
        %v1968 = vand.u32 %v271, 4294901760
        %v1969 = vsub.f32 %v271, %v1968
        %v1970 = vand.u32 %v1969, 4294901760
        %v1971 = vsub.f32 %v1969, %v1970
        %v1972 = vand.u32 %v1971, 4294901760
        %1973 = vmatpush1.msra.mxu0 %v1972
        %v1974 = vand.u32 %v276, 4294901760
        %v1975 = vsub.f32 %v276, %v1974
        %v1976 = vand.u32 %v1975, 4294901760
        %v1977 = vsub.f32 %v1975, %v1976
        %v1978 = vand.u32 %v1977, 4294901760
        %1979 = vmatprep.subr.mxu0 %v1978
        %v1980 = vand.u32 %v275, 4294901760
        %v1981 = vsub.f32 %v275, %v1980
        %v1982 = vand.u32 %v1981, 4294901760
        %v1983 = vsub.f32 %v1981, %v1982
        %v1984 = vand.u32 %v1983, 4294901760
        %1985 = vmatpush1.msra.mxu0 %v1984
        %v1986 = vand.u32 %v280, 4294901760
        %v1987 = vsub.f32 %v280, %v1986
        %v1988 = vand.u32 %v1987, 4294901760
        %v1989 = vsub.f32 %v1987, %v1988
        %v1990 = vand.u32 %v1989, 4294901760
        %1991 = vmatprep.subr.mxu0 %v1990
        %v1992 = vand.u32 %v279, 4294901760
        %v1993 = vsub.f32 %v279, %v1992
        %v1994 = vand.u32 %v1993, 4294901760
        %v1995 = vsub.f32 %v1993, %v1994
        %v1996 = vand.u32 %v1995, 4294901760
        %1997 = vmatpush1.msra.mxu0 %v1996
        %v1998 = vand.u32 %v284, 4294901760
        %v1999 = vsub.f32 %v284, %v1998
        %v2000 = vand.u32 %v1999, 4294901760
        %v2001 = vsub.f32 %v1999, %v2000
        %v2002 = vand.u32 %v2001, 4294901760
        %2003 = vmatprep.subr.mxu0 %v2002
        %v2004 = vand.u32 %v283, 4294901760
        %v2005 = vsub.f32 %v283, %v2004
        %v2006 = vand.u32 %v2005, 4294901760
        %v2007 = vsub.f32 %v2005, %v2006
        %v2008 = vand.u32 %v2007, 4294901760
        %2009 = vmatpush1.msra.mxu0 %v2008
        %v2010 = vand.u32 %v288, 4294901760
        %v2011 = vsub.f32 %v288, %v2010
        %v2012 = vand.u32 %v2011, 4294901760
        %v2013 = vsub.f32 %v2011, %v2012
        %v2014 = vand.u32 %v2013, 4294901760
        %2015 = vmatprep.subr.mxu0 %v2014
        %v2016 = vand.u32 %v287, 4294901760
        %v2017 = vsub.f32 %v287, %v2016
        %v2018 = vand.u32 %v2017, 4294901760
        %v2019 = vsub.f32 %v2017, %v2018
        %v2020 = vand.u32 %v2019, 4294901760
        %2021 = vmatpush1.msra.mxu0 %v2020
        %v2022 = vand.u32 %v292, 4294901760
        %v2023 = vsub.f32 %v292, %v2022
        %v2024 = vand.u32 %v2023, 4294901760
        %v2025 = vsub.f32 %v2023, %v2024
        %v2026 = vand.u32 %v2025, 4294901760
        %2027 = vmatprep.subr.mxu0 %v2026
        %v2028 = vand.u32 %v291, 4294901760
        %v2029 = vsub.f32 %v291, %v2028
        %v2030 = vand.u32 %v2029, 4294901760
        %v2031 = vsub.f32 %v2029, %v2030
        %v2032 = vand.u32 %v2031, 4294901760
        %2033 = vmatpush1.msra.mxu0 %v2032
        %v2034 = vand.u32 %v296, 4294901760
        %v2035 = vsub.f32 %v296, %v2034
        %v2036 = vand.u32 %v2035, 4294901760
        %v2037 = vsub.f32 %v2035, %v2036
        %v2038 = vand.u32 %v2037, 4294901760
        %2039 = vmatprep.subr.mxu0 %v2038
        %v2040 = vand.u32 %v295, 4294901760
        %v2041 = vsub.f32 %v295, %v2040
        %v2042 = vand.u32 %v2041, 4294901760
        %v2043 = vsub.f32 %v2041, %v2042
        %v2044 = vand.u32 %v2043, 4294901760
        %2045 = vmatpush1.msra.mxu0 %v2044
        %v2046 = vand.u32 %v300, 4294901760
        %v2047 = vsub.f32 %v300, %v2046
        %v2048 = vand.u32 %v2047, 4294901760
        %v2049 = vsub.f32 %v2047, %v2048
        %v2050 = vand.u32 %v2049, 4294901760
        %2051 = vmatprep.subr.mxu0 %v2050
        %v2052 = vand.u32 %v299, 4294901760
        %v2053 = vsub.f32 %v299, %v2052
        %v2054 = vand.u32 %v2053, 4294901760
        %v2055 = vsub.f32 %v2053, %v2054
        %v2056 = vand.u32 %v2055, 4294901760
        %2057 = vmatpush1.msra.mxu0 %v2056
        %v2058 = vand.u32 %v304, 4294901760
        %v2059 = vsub.f32 %v304, %v2058
        %v2060 = vand.u32 %v2059, 4294901760
        %v2061 = vsub.f32 %v2059, %v2060
        %v2062 = vand.u32 %v2061, 4294901760
        %2063 = vmatprep.subr.mxu0 %v2062
        %v2064 = vand.u32 %v303, 4294901760
        %v2065 = vsub.f32 %v303, %v2064
        %v2066 = vand.u32 %v2065, 4294901760
        %v2067 = vsub.f32 %v2065, %v2066
        %v2068 = vand.u32 %v2067, 4294901760
        %2069 = vmatpush1.msra.mxu0 %v2068
        %v2070 = vand.u32 %v308, 4294901760
        %v2071 = vsub.f32 %v308, %v2070
        %v2072 = vand.u32 %v2071, 4294901760
        %v2073 = vsub.f32 %v2071, %v2072
        %v2074 = vand.u32 %v2073, 4294901760
        %2075 = vmatprep.subr.mxu0 %v2074
        %v2076 = vand.u32 %v307, 4294901760
        %v2077 = vsub.f32 %v307, %v2076
        %v2078 = vand.u32 %v2077, 4294901760
        %v2079 = vsub.f32 %v2077, %v2078
        %v2080 = vand.u32 %v2079, 4294901760
        %2081 = vmatpush1.msra.mxu0 %v2080
        %v2082 = vand.u32 %v312, 4294901760
        %v2083 = vsub.f32 %v312, %v2082
        %v2084 = vand.u32 %v2083, 4294901760
        %v2085 = vsub.f32 %v2083, %v2084
        %v2086 = vand.u32 %v2085, 4294901760
        %2087 = vmatprep.subr.mxu0 %v2086
        %v2088 = vand.u32 %v311, 4294901760
        %v2089 = vsub.f32 %v311, %v2088
        %v2090 = vand.u32 %v2089, 4294901760
        %v2091 = vsub.f32 %v2089, %v2090
        %v2092 = vand.u32 %v2091, 4294901760
        %2093 = vmatpush1.msra.mxu0 %v2092
        %v2094 = vand.u32 %v316, 4294901760
        %v2095 = vsub.f32 %v316, %v2094
        %v2096 = vand.u32 %v2095, 4294901760
        %v2097 = vsub.f32 %v2095, %v2096
        %v2098 = vand.u32 %v2097, 4294901760
        %2099 = vmatprep.subr.mxu0 %v2098
        %v2100 = vand.u32 %v315, 4294901760
        %v2101 = vsub.f32 %v315, %v2100
        %v2102 = vand.u32 %v2101, 4294901760
        %v2103 = vsub.f32 %v2101, %v2102
        %v2104 = vand.u32 %v2103, 4294901760
        %2105 = vmatpush1.msra.mxu0 %v2104
        %v2106 = vand.u32 %v320, 4294901760
        %v2107 = vsub.f32 %v320, %v2106
        %v2108 = vand.u32 %v2107, 4294901760
        %v2109 = vsub.f32 %v2107, %v2108
        %v2110 = vand.u32 %v2109, 4294901760
        %2111 = vmatprep.subr.mxu0 %v2110
        %v2112 = vand.u32 %v319, 4294901760
        %v2113 = vsub.f32 %v319, %v2112
        %v2114 = vand.u32 %v2113, 4294901760
        %v2115 = vsub.f32 %v2113, %v2114
        %v2116 = vand.u32 %v2115, 4294901760
        %2117 = vmatpush1.msra.mxu0 %v2116
        %v2118 = vand.u32 %v324, 4294901760
        %v2119 = vsub.f32 %v324, %v2118
        %v2120 = vand.u32 %v2119, 4294901760
        %v2121 = vsub.f32 %v2119, %v2120
        %v2122 = vand.u32 %v2121, 4294901760
        %2123 = vmatprep.subr.mxu0 %v2122
        %v2124 = vand.u32 %v323, 4294901760
        %v2125 = vsub.f32 %v323, %v2124
        %v2126 = vand.u32 %v2125, 4294901760
        %v2127 = vsub.f32 %v2125, %v2126
        %v2128 = vand.u32 %v2127, 4294901760
        %2129 = vmatpush1.msra.mxu0 %v2128
        %v2130 = vand.u32 %v328, 4294901760
        %v2131 = vsub.f32 %v328, %v2130
        %v2132 = vand.u32 %v2131, 4294901760
        %v2133 = vsub.f32 %v2131, %v2132
        %v2134 = vand.u32 %v2133, 4294901760
        %2135 = vmatprep.subr.mxu0 %v2134
        %v2136 = vand.u32 %v327, 4294901760
        %v2137 = vsub.f32 %v327, %v2136
        %v2138 = vand.u32 %v2137, 4294901760
        %v2139 = vsub.f32 %v2137, %v2138
        %v2140 = vand.u32 %v2139, 4294901760
        %2141 = vmatpush1.msra.mxu0 %v2140
        %v2142 = vand.u32 %v200, 4294901760
        %2143 = vmatprep.mubr.f32.mxu0 %v2142
        %v2144 = vand.u32 %v199, 4294901760
        %2145 = vmatmul.mubr.f32.gmra.mrb[0].mxu0 %v2144
        %v2146 = vpop.f32.mrb[0].mxu0
        %v2147 = vadd.f32 %v1754, %v2146
        %v2148 = vpop.f32.mrb[0].mxu0
        %v2149 = vadd.f32 %v1756, %v2148
        %2150 = vdwg.mxu0
        %v2151 = vand.u32 %v204, 4294901760
        %v2152 = vsub.f32 %v204, %v2151
        %2153 = vmatprep.subr.mxu0 %v2152
        %v2154 = vand.u32 %v203, 4294901760
        %v2155 = vsub.f32 %v203, %v2154
        %2156 = vmatpush1.msra.mxu0 %v2155
        %v2157 = vand.u32 %v208, 4294901760
        %v2158 = vsub.f32 %v208, %v2157
        %2159 = vmatprep.subr.mxu0 %v2158
        %v2160 = vand.u32 %v207, 4294901760
        %v2161 = vsub.f32 %v207, %v2160
        %2162 = vmatpush1.msra.mxu0 %v2161
        %v2163 = vand.u32 %v212, 4294901760
        %v2164 = vsub.f32 %v212, %v2163
        %2165 = vmatprep.subr.mxu0 %v2164
        %v2166 = vand.u32 %v211, 4294901760
        %v2167 = vsub.f32 %v211, %v2166
        %2168 = vmatpush1.msra.mxu0 %v2167
        %v2169 = vand.u32 %v216, 4294901760
        %v2170 = vsub.f32 %v216, %v2169
        %2171 = vmatprep.subr.mxu0 %v2170
        %v2172 = vand.u32 %v215, 4294901760
        %v2173 = vsub.f32 %v215, %v2172
        %2174 = vmatpush1.msra.mxu0 %v2173
        %v2175 = vand.u32 %v220, 4294901760
        %v2176 = vsub.f32 %v220, %v2175
        %2177 = vmatprep.subr.mxu0 %v2176
        %v2178 = vand.u32 %v219, 4294901760
        %v2179 = vsub.f32 %v219, %v2178
        %2180 = vmatpush1.msra.mxu0 %v2179
        %v2181 = vand.u32 %v224, 4294901760
        %v2182 = vsub.f32 %v224, %v2181
        %2183 = vmatprep.subr.mxu0 %v2182
        %v2184 = vand.u32 %v223, 4294901760
        %v2185 = vsub.f32 %v223, %v2184
        %2186 = vmatpush1.msra.mxu0 %v2185
        %v2187 = vand.u32 %v228, 4294901760
        %v2188 = vsub.f32 %v228, %v2187
        %2189 = vmatprep.subr.mxu0 %v2188
        %v2190 = vand.u32 %v227, 4294901760
        %v2191 = vsub.f32 %v227, %v2190
        %2192 = vmatpush1.msra.mxu0 %v2191
        %v2193 = vand.u32 %v232, 4294901760
        %v2194 = vsub.f32 %v232, %v2193
        %2195 = vmatprep.subr.mxu0 %v2194
        %v2196 = vand.u32 %v231, 4294901760
        %v2197 = vsub.f32 %v231, %v2196
        %2198 = vmatpush1.msra.mxu0 %v2197
        %v2199 = vand.u32 %v236, 4294901760
        %v2200 = vsub.f32 %v236, %v2199
        %2201 = vmatprep.subr.mxu0 %v2200
        %v2202 = vand.u32 %v235, 4294901760
        %v2203 = vsub.f32 %v235, %v2202
        %2204 = vmatpush1.msra.mxu0 %v2203
        %v2205 = vand.u32 %v240, 4294901760
        %v2206 = vsub.f32 %v240, %v2205
        %2207 = vmatprep.subr.mxu0 %v2206
        %v2208 = vand.u32 %v239, 4294901760
        %v2209 = vsub.f32 %v239, %v2208
        %2210 = vmatpush1.msra.mxu0 %v2209
        %v2211 = vand.u32 %v244, 4294901760
        %v2212 = vsub.f32 %v244, %v2211
        %2213 = vmatprep.subr.mxu0 %v2212
        %v2214 = vand.u32 %v243, 4294901760
        %v2215 = vsub.f32 %v243, %v2214
        %2216 = vmatpush1.msra.mxu0 %v2215
        %v2217 = vand.u32 %v248, 4294901760
        %v2218 = vsub.f32 %v248, %v2217
        %2219 = vmatprep.subr.mxu0 %v2218
        %v2220 = vand.u32 %v247, 4294901760
        %v2221 = vsub.f32 %v247, %v2220
        %2222 = vmatpush1.msra.mxu0 %v2221
        %v2223 = vand.u32 %v252, 4294901760
        %v2224 = vsub.f32 %v252, %v2223
        %2225 = vmatprep.subr.mxu0 %v2224
        %v2226 = vand.u32 %v251, 4294901760
        %v2227 = vsub.f32 %v251, %v2226
        %2228 = vmatpush1.msra.mxu0 %v2227
        %v2229 = vand.u32 %v256, 4294901760
        %v2230 = vsub.f32 %v256, %v2229
        %2231 = vmatprep.subr.mxu0 %v2230
        %v2232 = vand.u32 %v255, 4294901760
        %v2233 = vsub.f32 %v255, %v2232
        %2234 = vmatpush1.msra.mxu0 %v2233
        %v2235 = vand.u32 %v260, 4294901760
        %v2236 = vsub.f32 %v260, %v2235
        %2237 = vmatprep.subr.mxu0 %v2236
        %v2238 = vand.u32 %v259, 4294901760
        %v2239 = vsub.f32 %v259, %v2238
        %2240 = vmatpush1.msra.mxu0 %v2239
        %v2241 = vand.u32 %v264, 4294901760
        %v2242 = vsub.f32 %v264, %v2241
        %2243 = vmatprep.subr.mxu0 %v2242
        %v2244 = vand.u32 %v263, 4294901760
        %v2245 = vsub.f32 %v263, %v2244
        %2246 = vmatpush1.msra.mxu0 %v2245
        %v2247 = vand.u32 %v268, 4294901760
        %v2248 = vsub.f32 %v268, %v2247
        %2249 = vmatprep.subr.mxu0 %v2248
        %v2250 = vand.u32 %v267, 4294901760
        %v2251 = vsub.f32 %v267, %v2250
        %2252 = vmatpush1.msra.mxu0 %v2251
        %v2253 = vand.u32 %v272, 4294901760
        %v2254 = vsub.f32 %v272, %v2253
        %2255 = vmatprep.subr.mxu0 %v2254
        %v2256 = vand.u32 %v271, 4294901760
        %v2257 = vsub.f32 %v271, %v2256
        %2258 = vmatpush1.msra.mxu0 %v2257
        %v2259 = vand.u32 %v276, 4294901760
        %v2260 = vsub.f32 %v276, %v2259
        %2261 = vmatprep.subr.mxu0 %v2260
        %v2262 = vand.u32 %v275, 4294901760
        %v2263 = vsub.f32 %v275, %v2262
        %2264 = vmatpush1.msra.mxu0 %v2263
        %v2265 = vand.u32 %v280, 4294901760
        %v2266 = vsub.f32 %v280, %v2265
        %2267 = vmatprep.subr.mxu0 %v2266
        %v2268 = vand.u32 %v279, 4294901760
        %v2269 = vsub.f32 %v279, %v2268
        %2270 = vmatpush1.msra.mxu0 %v2269
        %v2271 = vand.u32 %v284, 4294901760
        %v2272 = vsub.f32 %v284, %v2271
        %2273 = vmatprep.subr.mxu0 %v2272
        %v2274 = vand.u32 %v283, 4294901760
        %v2275 = vsub.f32 %v283, %v2274
        %2276 = vmatpush1.msra.mxu0 %v2275
        %v2277 = vand.u32 %v288, 4294901760
        %v2278 = vsub.f32 %v288, %v2277
        %2279 = vmatprep.subr.mxu0 %v2278
        %v2280 = vand.u32 %v287, 4294901760
        %v2281 = vsub.f32 %v287, %v2280
        %2282 = vmatpush1.msra.mxu0 %v2281
        %v2283 = vand.u32 %v292, 4294901760
        %v2284 = vsub.f32 %v292, %v2283
        %2285 = vmatprep.subr.mxu0 %v2284
        %v2286 = vand.u32 %v291, 4294901760
        %v2287 = vsub.f32 %v291, %v2286
        %2288 = vmatpush1.msra.mxu0 %v2287
        %v2289 = vand.u32 %v296, 4294901760
        %v2290 = vsub.f32 %v296, %v2289
        %2291 = vmatprep.subr.mxu0 %v2290
        %v2292 = vand.u32 %v295, 4294901760
        %v2293 = vsub.f32 %v295, %v2292
        %2294 = vmatpush1.msra.mxu0 %v2293
        %v2295 = vand.u32 %v300, 4294901760
        %v2296 = vsub.f32 %v300, %v2295
        %2297 = vmatprep.subr.mxu0 %v2296
        %v2298 = vand.u32 %v299, 4294901760
        %v2299 = vsub.f32 %v299, %v2298
        %2300 = vmatpush1.msra.mxu0 %v2299
        %v2301 = vand.u32 %v304, 4294901760
        %v2302 = vsub.f32 %v304, %v2301
        %2303 = vmatprep.subr.mxu0 %v2302
        %v2304 = vand.u32 %v303, 4294901760
        %v2305 = vsub.f32 %v303, %v2304
        %2306 = vmatpush1.msra.mxu0 %v2305
        %v2307 = vand.u32 %v308, 4294901760
        %v2308 = vsub.f32 %v308, %v2307
        %2309 = vmatprep.subr.mxu0 %v2308
        %v2310 = vand.u32 %v307, 4294901760
        %v2311 = vsub.f32 %v307, %v2310
        %2312 = vmatpush1.msra.mxu0 %v2311
        %v2313 = vand.u32 %v312, 4294901760
        %v2314 = vsub.f32 %v312, %v2313
        %2315 = vmatprep.subr.mxu0 %v2314
        %v2316 = vand.u32 %v311, 4294901760
        %v2317 = vsub.f32 %v311, %v2316
        %2318 = vmatpush1.msra.mxu0 %v2317
        %v2319 = vand.u32 %v316, 4294901760
        %v2320 = vsub.f32 %v316, %v2319
        %2321 = vmatprep.subr.mxu0 %v2320
        %v2322 = vand.u32 %v315, 4294901760
        %v2323 = vsub.f32 %v315, %v2322
        %2324 = vmatpush1.msra.mxu0 %v2323
        %v2325 = vand.u32 %v320, 4294901760
        %v2326 = vsub.f32 %v320, %v2325
        %2327 = vmatprep.subr.mxu0 %v2326
        %v2328 = vand.u32 %v319, 4294901760
        %v2329 = vsub.f32 %v319, %v2328
        %2330 = vmatpush1.msra.mxu0 %v2329
        %v2331 = vand.u32 %v324, 4294901760
        %v2332 = vsub.f32 %v324, %v2331
        %2333 = vmatprep.subr.mxu0 %v2332
        %v2334 = vand.u32 %v323, 4294901760
        %v2335 = vsub.f32 %v323, %v2334
        %2336 = vmatpush1.msra.mxu0 %v2335
        %v2337 = vand.u32 %v328, 4294901760
        %v2338 = vsub.f32 %v328, %v2337
        %2339 = vmatprep.subr.mxu0 %v2338
        %v2340 = vand.u32 %v327, 4294901760
        %v2341 = vsub.f32 %v327, %v2340
        %2342 = vmatpush1.msra.mxu0 %v2341
        %v2343 = vand.u32 %v200, 4294901760
        %v2344 = vsub.f32 %v200, %v2343
        %2345 = vmatprep.mubr.f32.mxu0 %v2344
        %v2346 = vand.u32 %v199, 4294901760
        %v2347 = vsub.f32 %v199, %v2346
        %2348 = vmatmul.mubr.f32.gmra.mrb[0].mxu0 %v2347
        %v2349 = vpop.f32.mrb[0].mxu0
        %v2350 = vadd.f32 %v2147, %v2349
        %v2351 = vpop.f32.mrb[0].mxu0
        %v2352 = vadd.f32 %v2149, %v2351
        %2353 = vdwg.mxu0
        %v2354 = vand.u32 %v204, 4294901760
        %2355 = vmatprep.subr.mxu0 %v2354
        %v2356 = vand.u32 %v203, 4294901760
        %2357 = vmatpush1.msra.mxu0 %v2356
        %v2358 = vand.u32 %v208, 4294901760
        %2359 = vmatprep.subr.mxu0 %v2358
        %v2360 = vand.u32 %v207, 4294901760
        %2361 = vmatpush1.msra.mxu0 %v2360
        %v2362 = vand.u32 %v212, 4294901760
        %2363 = vmatprep.subr.mxu0 %v2362
        %v2364 = vand.u32 %v211, 4294901760
        %2365 = vmatpush1.msra.mxu0 %v2364
        %v2366 = vand.u32 %v216, 4294901760
        %2367 = vmatprep.subr.mxu0 %v2366
        %v2368 = vand.u32 %v215, 4294901760
        %2369 = vmatpush1.msra.mxu0 %v2368
        %v2370 = vand.u32 %v220, 4294901760
        %2371 = vmatprep.subr.mxu0 %v2370
        %v2372 = vand.u32 %v219, 4294901760
        %2373 = vmatpush1.msra.mxu0 %v2372
        %v2374 = vand.u32 %v224, 4294901760
        %2375 = vmatprep.subr.mxu0 %v2374
        %v2376 = vand.u32 %v223, 4294901760
        %2377 = vmatpush1.msra.mxu0 %v2376
        %v2378 = vand.u32 %v228, 4294901760
        %2379 = vmatprep.subr.mxu0 %v2378
        %v2380 = vand.u32 %v227, 4294901760
        %2381 = vmatpush1.msra.mxu0 %v2380
        %v2382 = vand.u32 %v232, 4294901760
        %2383 = vmatprep.subr.mxu0 %v2382
        %v2384 = vand.u32 %v231, 4294901760
        %2385 = vmatpush1.msra.mxu0 %v2384
        %v2386 = vand.u32 %v236, 4294901760
        %2387 = vmatprep.subr.mxu0 %v2386
        %v2388 = vand.u32 %v235, 4294901760
        %2389 = vmatpush1.msra.mxu0 %v2388
        %v2390 = vand.u32 %v240, 4294901760
        %2391 = vmatprep.subr.mxu0 %v2390
        %v2392 = vand.u32 %v239, 4294901760
        %2393 = vmatpush1.msra.mxu0 %v2392
        %v2394 = vand.u32 %v244, 4294901760
        %2395 = vmatprep.subr.mxu0 %v2394
        %v2396 = vand.u32 %v243, 4294901760
        %2397 = vmatpush1.msra.mxu0 %v2396
        %v2398 = vand.u32 %v248, 4294901760
        %2399 = vmatprep.subr.mxu0 %v2398
        %v2400 = vand.u32 %v247, 4294901760
        %2401 = vmatpush1.msra.mxu0 %v2400
        %v2402 = vand.u32 %v252, 4294901760
        %2403 = vmatprep.subr.mxu0 %v2402
        %v2404 = vand.u32 %v251, 4294901760
        %2405 = vmatpush1.msra.mxu0 %v2404
        %v2406 = vand.u32 %v256, 4294901760
        %2407 = vmatprep.subr.mxu0 %v2406
        %v2408 = vand.u32 %v255, 4294901760
        %2409 = vmatpush1.msra.mxu0 %v2408
        %v2410 = vand.u32 %v260, 4294901760
        %2411 = vmatprep.subr.mxu0 %v2410
        %v2412 = vand.u32 %v259, 4294901760
        %2413 = vmatpush1.msra.mxu0 %v2412
        %v2414 = vand.u32 %v264, 4294901760
        %2415 = vmatprep.subr.mxu0 %v2414
        %v2416 = vand.u32 %v263, 4294901760
        %2417 = vmatpush1.msra.mxu0 %v2416
        %v2418 = vand.u32 %v268, 4294901760
        %2419 = vmatprep.subr.mxu0 %v2418
        %v2420 = vand.u32 %v267, 4294901760
        %2421 = vmatpush1.msra.mxu0 %v2420
        %v2422 = vand.u32 %v272, 4294901760
        %2423 = vmatprep.subr.mxu0 %v2422
        %v2424 = vand.u32 %v271, 4294901760
        %2425 = vmatpush1.msra.mxu0 %v2424
        %v2426 = vand.u32 %v276, 4294901760
        %2427 = vmatprep.subr.mxu0 %v2426
        %v2428 = vand.u32 %v275, 4294901760
        %2429 = vmatpush1.msra.mxu0 %v2428
        %v2430 = vand.u32 %v280, 4294901760
        %2431 = vmatprep.subr.mxu0 %v2430
        %v2432 = vand.u32 %v279, 4294901760
        %2433 = vmatpush1.msra.mxu0 %v2432
        %v2434 = vand.u32 %v284, 4294901760
        %2435 = vmatprep.subr.mxu0 %v2434
        %v2436 = vand.u32 %v283, 4294901760
        %2437 = vmatpush1.msra.mxu0 %v2436
        %v2438 = vand.u32 %v288, 4294901760
        %2439 = vmatprep.subr.mxu0 %v2438
        %v2440 = vand.u32 %v287, 4294901760
        %2441 = vmatpush1.msra.mxu0 %v2440
        %v2442 = vand.u32 %v292, 4294901760
        %2443 = vmatprep.subr.mxu0 %v2442
        %v2444 = vand.u32 %v291, 4294901760
        %2445 = vmatpush1.msra.mxu0 %v2444
        %v2446 = vand.u32 %v296, 4294901760
        %2447 = vmatprep.subr.mxu0 %v2446
        %v2448 = vand.u32 %v295, 4294901760
        %2449 = vmatpush1.msra.mxu0 %v2448
        %v2450 = vand.u32 %v300, 4294901760
        %2451 = vmatprep.subr.mxu0 %v2450
        %v2452 = vand.u32 %v299, 4294901760
        %2453 = vmatpush1.msra.mxu0 %v2452
        %v2454 = vand.u32 %v304, 4294901760
        %2455 = vmatprep.subr.mxu0 %v2454
        %v2456 = vand.u32 %v303, 4294901760
        %2457 = vmatpush1.msra.mxu0 %v2456
        %v2458 = vand.u32 %v308, 4294901760
        %2459 = vmatprep.subr.mxu0 %v2458
        %v2460 = vand.u32 %v307, 4294901760
        %2461 = vmatpush1.msra.mxu0 %v2460
        %v2462 = vand.u32 %v312, 4294901760
        %2463 = vmatprep.subr.mxu0 %v2462
        %v2464 = vand.u32 %v311, 4294901760
        %2465 = vmatpush1.msra.mxu0 %v2464
        %v2466 = vand.u32 %v316, 4294901760
        %2467 = vmatprep.subr.mxu0 %v2466
        %v2468 = vand.u32 %v315, 4294901760
        %2469 = vmatpush1.msra.mxu0 %v2468
        %v2470 = vand.u32 %v320, 4294901760
        %2471 = vmatprep.subr.mxu0 %v2470
        %v2472 = vand.u32 %v319, 4294901760
        %2473 = vmatpush1.msra.mxu0 %v2472
        %v2474 = vand.u32 %v324, 4294901760
        %2475 = vmatprep.subr.mxu0 %v2474
        %v2476 = vand.u32 %v323, 4294901760
        %2477 = vmatpush1.msra.mxu0 %v2476
        %v2478 = vand.u32 %v328, 4294901760
        %2479 = vmatprep.subr.mxu0 %v2478
        %v2480 = vand.u32 %v327, 4294901760
        %2481 = vmatpush1.msra.mxu0 %v2480
        %v2482 = vand.u32 %v200, 4294901760
        %v2483 = vsub.f32 %v200, %v2482
        %v2484 = vand.u32 %v2483, 4294901760
        %2485 = vmatprep.mubr.f32.mxu0 %v2484
        %v2486 = vand.u32 %v199, 4294901760
        %v2487 = vsub.f32 %v199, %v2486
        %v2488 = vand.u32 %v2487, 4294901760
        %2489 = vmatmul.mubr.f32.gmra.mrb[0].mxu0 %v2488
        %v2490 = vpop.f32.mrb[0].mxu0
        %v2491 = vadd.f32 %v2350, %v2490
        %v2492 = vpop.f32.mrb[0].mxu0
        %v2493 = vadd.f32 %v2352, %v2492
        %2494 = vdwg.mxu0
        %v2495 = vand.u32 %v204, 4294901760
        %v2496 = vsub.f32 %v204, %v2495
        %v2497 = vand.u32 %v2496, 4294901760
        %2498 = vmatprep.subr.mxu0 %v2497
        %v2499 = vand.u32 %v203, 4294901760
        %v2500 = vsub.f32 %v203, %v2499
        %v2501 = vand.u32 %v2500, 4294901760
        %2502 = vmatpush1.msra.mxu0 %v2501
        %v2503 = vand.u32 %v208, 4294901760
        %v2504 = vsub.f32 %v208, %v2503
        %v2505 = vand.u32 %v2504, 4294901760
        %2506 = vmatprep.subr.mxu0 %v2505
        %v2507 = vand.u32 %v207, 4294901760
        %v2508 = vsub.f32 %v207, %v2507
        %v2509 = vand.u32 %v2508, 4294901760
        %2510 = vmatpush1.msra.mxu0 %v2509
        %v2511 = vand.u32 %v212, 4294901760
        %v2512 = vsub.f32 %v212, %v2511
        %v2513 = vand.u32 %v2512, 4294901760
        %2514 = vmatprep.subr.mxu0 %v2513
        %v2515 = vand.u32 %v211, 4294901760
        %v2516 = vsub.f32 %v211, %v2515
        %v2517 = vand.u32 %v2516, 4294901760
        %2518 = vmatpush1.msra.mxu0 %v2517
        %v2519 = vand.u32 %v216, 4294901760
        %v2520 = vsub.f32 %v216, %v2519
        %v2521 = vand.u32 %v2520, 4294901760
        %2522 = vmatprep.subr.mxu0 %v2521
        %v2523 = vand.u32 %v215, 4294901760
        %v2524 = vsub.f32 %v215, %v2523
        %v2525 = vand.u32 %v2524, 4294901760
        %2526 = vmatpush1.msra.mxu0 %v2525
        %v2527 = vand.u32 %v220, 4294901760
        %v2528 = vsub.f32 %v220, %v2527
        %v2529 = vand.u32 %v2528, 4294901760
        %2530 = vmatprep.subr.mxu0 %v2529
        %v2531 = vand.u32 %v219, 4294901760
        %v2532 = vsub.f32 %v219, %v2531
        %v2533 = vand.u32 %v2532, 4294901760
        %2534 = vmatpush1.msra.mxu0 %v2533
        %v2535 = vand.u32 %v224, 4294901760
        %v2536 = vsub.f32 %v224, %v2535
        %v2537 = vand.u32 %v2536, 4294901760
        %2538 = vmatprep.subr.mxu0 %v2537
        %v2539 = vand.u32 %v223, 4294901760
        %v2540 = vsub.f32 %v223, %v2539
        %v2541 = vand.u32 %v2540, 4294901760
        %2542 = vmatpush1.msra.mxu0 %v2541
        %v2543 = vand.u32 %v228, 4294901760
        %v2544 = vsub.f32 %v228, %v2543
        %v2545 = vand.u32 %v2544, 4294901760
        %2546 = vmatprep.subr.mxu0 %v2545
        %v2547 = vand.u32 %v227, 4294901760
        %v2548 = vsub.f32 %v227, %v2547
        %v2549 = vand.u32 %v2548, 4294901760
        %2550 = vmatpush1.msra.mxu0 %v2549
        %v2551 = vand.u32 %v232, 4294901760
        %v2552 = vsub.f32 %v232, %v2551
        %v2553 = vand.u32 %v2552, 4294901760
        %2554 = vmatprep.subr.mxu0 %v2553
        %v2555 = vand.u32 %v231, 4294901760
        %v2556 = vsub.f32 %v231, %v2555
        %v2557 = vand.u32 %v2556, 4294901760
        %2558 = vmatpush1.msra.mxu0 %v2557
        %v2559 = vand.u32 %v236, 4294901760
        %v2560 = vsub.f32 %v236, %v2559
        %v2561 = vand.u32 %v2560, 4294901760
        %2562 = vmatprep.subr.mxu0 %v2561
        %v2563 = vand.u32 %v235, 4294901760
        %v2564 = vsub.f32 %v235, %v2563
        %v2565 = vand.u32 %v2564, 4294901760
        %2566 = vmatpush1.msra.mxu0 %v2565
        %v2567 = vand.u32 %v240, 4294901760
        %v2568 = vsub.f32 %v240, %v2567
        %v2569 = vand.u32 %v2568, 4294901760
        %2570 = vmatprep.subr.mxu0 %v2569
        %v2571 = vand.u32 %v239, 4294901760
        %v2572 = vsub.f32 %v239, %v2571
        %v2573 = vand.u32 %v2572, 4294901760
        %2574 = vmatpush1.msra.mxu0 %v2573
        %v2575 = vand.u32 %v244, 4294901760
        %v2576 = vsub.f32 %v244, %v2575
        %v2577 = vand.u32 %v2576, 4294901760
        %2578 = vmatprep.subr.mxu0 %v2577
        %v2579 = vand.u32 %v243, 4294901760
        %v2580 = vsub.f32 %v243, %v2579
        %v2581 = vand.u32 %v2580, 4294901760
        %2582 = vmatpush1.msra.mxu0 %v2581
        %v2583 = vand.u32 %v248, 4294901760
        %v2584 = vsub.f32 %v248, %v2583
        %v2585 = vand.u32 %v2584, 4294901760
        %2586 = vmatprep.subr.mxu0 %v2585
        %v2587 = vand.u32 %v247, 4294901760
        %v2588 = vsub.f32 %v247, %v2587
        %v2589 = vand.u32 %v2588, 4294901760
        %2590 = vmatpush1.msra.mxu0 %v2589
        %v2591 = vand.u32 %v252, 4294901760
        %v2592 = vsub.f32 %v252, %v2591
        %v2593 = vand.u32 %v2592, 4294901760
        %2594 = vmatprep.subr.mxu0 %v2593
        %v2595 = vand.u32 %v251, 4294901760
        %v2596 = vsub.f32 %v251, %v2595
        %v2597 = vand.u32 %v2596, 4294901760
        %2598 = vmatpush1.msra.mxu0 %v2597
        %v2599 = vand.u32 %v256, 4294901760
        %v2600 = vsub.f32 %v256, %v2599
        %v2601 = vand.u32 %v2600, 4294901760
        %2602 = vmatprep.subr.mxu0 %v2601
        %v2603 = vand.u32 %v255, 4294901760
        %v2604 = vsub.f32 %v255, %v2603
        %v2605 = vand.u32 %v2604, 4294901760
        %2606 = vmatpush1.msra.mxu0 %v2605
        %v2607 = vand.u32 %v260, 4294901760
        %v2608 = vsub.f32 %v260, %v2607
        %v2609 = vand.u32 %v2608, 4294901760
        %2610 = vmatprep.subr.mxu0 %v2609
        %v2611 = vand.u32 %v259, 4294901760
        %v2612 = vsub.f32 %v259, %v2611
        %v2613 = vand.u32 %v2612, 4294901760
        %2614 = vmatpush1.msra.mxu0 %v2613
        %v2615 = vand.u32 %v264, 4294901760
        %v2616 = vsub.f32 %v264, %v2615
        %v2617 = vand.u32 %v2616, 4294901760
        %2618 = vmatprep.subr.mxu0 %v2617
        %v2619 = vand.u32 %v263, 4294901760
        %v2620 = vsub.f32 %v263, %v2619
        %v2621 = vand.u32 %v2620, 4294901760
        %2622 = vmatpush1.msra.mxu0 %v2621
        %v2623 = vand.u32 %v268, 4294901760
        %v2624 = vsub.f32 %v268, %v2623
        %v2625 = vand.u32 %v2624, 4294901760
        %2626 = vmatprep.subr.mxu0 %v2625
        %v2627 = vand.u32 %v267, 4294901760
        %v2628 = vsub.f32 %v267, %v2627
        %v2629 = vand.u32 %v2628, 4294901760
        %2630 = vmatpush1.msra.mxu0 %v2629
        %v2631 = vand.u32 %v272, 4294901760
        %v2632 = vsub.f32 %v272, %v2631
        %v2633 = vand.u32 %v2632, 4294901760
        %2634 = vmatprep.subr.mxu0 %v2633
        %v2635 = vand.u32 %v271, 4294901760
        %v2636 = vsub.f32 %v271, %v2635
        %v2637 = vand.u32 %v2636, 4294901760
        %2638 = vmatpush1.msra.mxu0 %v2637
        %v2639 = vand.u32 %v276, 4294901760
        %v2640 = vsub.f32 %v276, %v2639
        %v2641 = vand.u32 %v2640, 4294901760
        %2642 = vmatprep.subr.mxu0 %v2641
        %v2643 = vand.u32 %v275, 4294901760
        %v2644 = vsub.f32 %v275, %v2643
        %v2645 = vand.u32 %v2644, 4294901760
        %2646 = vmatpush1.msra.mxu0 %v2645
        %v2647 = vand.u32 %v280, 4294901760
        %v2648 = vsub.f32 %v280, %v2647
        %v2649 = vand.u32 %v2648, 4294901760
        %2650 = vmatprep.subr.mxu0 %v2649
        %v2651 = vand.u32 %v279, 4294901760
        %v2652 = vsub.f32 %v279, %v2651
        %v2653 = vand.u32 %v2652, 4294901760
        %2654 = vmatpush1.msra.mxu0 %v2653
        %v2655 = vand.u32 %v284, 4294901760
        %v2656 = vsub.f32 %v284, %v2655
        %v2657 = vand.u32 %v2656, 4294901760
        %2658 = vmatprep.subr.mxu0 %v2657
        %v2659 = vand.u32 %v283, 4294901760
        %v2660 = vsub.f32 %v283, %v2659
        %v2661 = vand.u32 %v2660, 4294901760
        %2662 = vmatpush1.msra.mxu0 %v2661
        %v2663 = vand.u32 %v288, 4294901760
        %v2664 = vsub.f32 %v288, %v2663
        %v2665 = vand.u32 %v2664, 4294901760
        %2666 = vmatprep.subr.mxu0 %v2665
        %v2667 = vand.u32 %v287, 4294901760
        %v2668 = vsub.f32 %v287, %v2667
        %v2669 = vand.u32 %v2668, 4294901760
        %2670 = vmatpush1.msra.mxu0 %v2669
        %v2671 = vand.u32 %v292, 4294901760
        %v2672 = vsub.f32 %v292, %v2671
        %v2673 = vand.u32 %v2672, 4294901760
        %2674 = vmatprep.subr.mxu0 %v2673
        %v2675 = vand.u32 %v291, 4294901760
        %v2676 = vsub.f32 %v291, %v2675
        %v2677 = vand.u32 %v2676, 4294901760
        %2678 = vmatpush1.msra.mxu0 %v2677
        %v2679 = vand.u32 %v296, 4294901760
        %v2680 = vsub.f32 %v296, %v2679
        %v2681 = vand.u32 %v2680, 4294901760
        %2682 = vmatprep.subr.mxu0 %v2681
        %v2683 = vand.u32 %v295, 4294901760
        %v2684 = vsub.f32 %v295, %v2683
        %v2685 = vand.u32 %v2684, 4294901760
        %2686 = vmatpush1.msra.mxu0 %v2685
        %v2687 = vand.u32 %v300, 4294901760
        %v2688 = vsub.f32 %v300, %v2687
        %v2689 = vand.u32 %v2688, 4294901760
        %2690 = vmatprep.subr.mxu0 %v2689
        %v2691 = vand.u32 %v299, 4294901760
        %v2692 = vsub.f32 %v299, %v2691
        %v2693 = vand.u32 %v2692, 4294901760
        %2694 = vmatpush1.msra.mxu0 %v2693
        %v2695 = vand.u32 %v304, 4294901760
        %v2696 = vsub.f32 %v304, %v2695
        %v2697 = vand.u32 %v2696, 4294901760
        %2698 = vmatprep.subr.mxu0 %v2697
        %v2699 = vand.u32 %v303, 4294901760
        %v2700 = vsub.f32 %v303, %v2699
        %v2701 = vand.u32 %v2700, 4294901760
        %2702 = vmatpush1.msra.mxu0 %v2701
        %v2703 = vand.u32 %v308, 4294901760
        %v2704 = vsub.f32 %v308, %v2703
        %v2705 = vand.u32 %v2704, 4294901760
        %2706 = vmatprep.subr.mxu0 %v2705
        %v2707 = vand.u32 %v307, 4294901760
        %v2708 = vsub.f32 %v307, %v2707
        %v2709 = vand.u32 %v2708, 4294901760
        %2710 = vmatpush1.msra.mxu0 %v2709
        %v2711 = vand.u32 %v312, 4294901760
        %v2712 = vsub.f32 %v312, %v2711
        %v2713 = vand.u32 %v2712, 4294901760
        %2714 = vmatprep.subr.mxu0 %v2713
        %v2715 = vand.u32 %v311, 4294901760
        %v2716 = vsub.f32 %v311, %v2715
        %v2717 = vand.u32 %v2716, 4294901760
        %2718 = vmatpush1.msra.mxu0 %v2717
        %v2719 = vand.u32 %v316, 4294901760
        %v2720 = vsub.f32 %v316, %v2719
        %v2721 = vand.u32 %v2720, 4294901760
        %2722 = vmatprep.subr.mxu0 %v2721
        %v2723 = vand.u32 %v315, 4294901760
        %v2724 = vsub.f32 %v315, %v2723
        %v2725 = vand.u32 %v2724, 4294901760
        %2726 = vmatpush1.msra.mxu0 %v2725
        %v2727 = vand.u32 %v320, 4294901760
        %v2728 = vsub.f32 %v320, %v2727
        %v2729 = vand.u32 %v2728, 4294901760
        %2730 = vmatprep.subr.mxu0 %v2729
        %v2731 = vand.u32 %v319, 4294901760
        %v2732 = vsub.f32 %v319, %v2731
        %v2733 = vand.u32 %v2732, 4294901760
        %2734 = vmatpush1.msra.mxu0 %v2733
        %v2735 = vand.u32 %v324, 4294901760
        %v2736 = vsub.f32 %v324, %v2735
        %v2737 = vand.u32 %v2736, 4294901760
        %2738 = vmatprep.subr.mxu0 %v2737
        %v2739 = vand.u32 %v323, 4294901760
        %v2740 = vsub.f32 %v323, %v2739
        %v2741 = vand.u32 %v2740, 4294901760
        %2742 = vmatpush1.msra.mxu0 %v2741
        %v2743 = vand.u32 %v328, 4294901760
        %v2744 = vsub.f32 %v328, %v2743
        %v2745 = vand.u32 %v2744, 4294901760
        %2746 = vmatprep.subr.mxu0 %v2745
        %v2747 = vand.u32 %v327, 4294901760
        %v2748 = vsub.f32 %v327, %v2747
        %v2749 = vand.u32 %v2748, 4294901760
        %2750 = vmatpush1.msra.mxu0 %v2749
        %v2751 = vand.u32 %v200, 4294901760
        %2752 = vmatprep.mubr.f32.mxu0 %v2751
        %v2753 = vand.u32 %v199, 4294901760
        %2754 = vmatmul.mubr.f32.gmra.mrb[0].mxu0 %v2753
        %v2755 = vpop.f32.mrb[0].mxu0
        %v2756 = vadd.f32 %v2491, %v2755
        %v2757 = vpop.f32.mrb[0].mxu0
        %v2758 = vadd.f32 %v2493, %v2757
        %2759 = vdwg.mxu0
        %v2760 = vand.u32 %v204, 4294901760
        %2761 = vmatprep.subr.mxu0 %v2760
        %v2762 = vand.u32 %v203, 4294901760
        %2763 = vmatpush1.msra.mxu0 %v2762
        %v2764 = vand.u32 %v208, 4294901760
        %2765 = vmatprep.subr.mxu0 %v2764
        %v2766 = vand.u32 %v207, 4294901760
        %2767 = vmatpush1.msra.mxu0 %v2766
        %v2768 = vand.u32 %v212, 4294901760
        %2769 = vmatprep.subr.mxu0 %v2768
        %v2770 = vand.u32 %v211, 4294901760
        %2771 = vmatpush1.msra.mxu0 %v2770
        %v2772 = vand.u32 %v216, 4294901760
        %2773 = vmatprep.subr.mxu0 %v2772
        %v2774 = vand.u32 %v215, 4294901760
        %2775 = vmatpush1.msra.mxu0 %v2774
        %v2776 = vand.u32 %v220, 4294901760
        %2777 = vmatprep.subr.mxu0 %v2776
        %v2778 = vand.u32 %v219, 4294901760
        %2779 = vmatpush1.msra.mxu0 %v2778
        %v2780 = vand.u32 %v224, 4294901760
        %2781 = vmatprep.subr.mxu0 %v2780
        %v2782 = vand.u32 %v223, 4294901760
        %2783 = vmatpush1.msra.mxu0 %v2782
        %v2784 = vand.u32 %v228, 4294901760
        %2785 = vmatprep.subr.mxu0 %v2784
        %v2786 = vand.u32 %v227, 4294901760
        %2787 = vmatpush1.msra.mxu0 %v2786
        %v2788 = vand.u32 %v232, 4294901760
        %2789 = vmatprep.subr.mxu0 %v2788
        %v2790 = vand.u32 %v231, 4294901760
        %2791 = vmatpush1.msra.mxu0 %v2790
        %v2792 = vand.u32 %v236, 4294901760
        %2793 = vmatprep.subr.mxu0 %v2792
        %v2794 = vand.u32 %v235, 4294901760
        %2795 = vmatpush1.msra.mxu0 %v2794
        %v2796 = vand.u32 %v240, 4294901760
        %2797 = vmatprep.subr.mxu0 %v2796
        %v2798 = vand.u32 %v239, 4294901760
        %2799 = vmatpush1.msra.mxu0 %v2798
        %v2800 = vand.u32 %v244, 4294901760
        %2801 = vmatprep.subr.mxu0 %v2800
        %v2802 = vand.u32 %v243, 4294901760
        %2803 = vmatpush1.msra.mxu0 %v2802
        %v2804 = vand.u32 %v248, 4294901760
        %2805 = vmatprep.subr.mxu0 %v2804
        %v2806 = vand.u32 %v247, 4294901760
        %2807 = vmatpush1.msra.mxu0 %v2806
        %v2808 = vand.u32 %v252, 4294901760
        %2809 = vmatprep.subr.mxu0 %v2808
        %v2810 = vand.u32 %v251, 4294901760
        %2811 = vmatpush1.msra.mxu0 %v2810
        %v2812 = vand.u32 %v256, 4294901760
        %2813 = vmatprep.subr.mxu0 %v2812
        %v2814 = vand.u32 %v255, 4294901760
        %2815 = vmatpush1.msra.mxu0 %v2814
        %v2816 = vand.u32 %v260, 4294901760
        %2817 = vmatprep.subr.mxu0 %v2816
        %v2818 = vand.u32 %v259, 4294901760
        %2819 = vmatpush1.msra.mxu0 %v2818
        %v2820 = vand.u32 %v264, 4294901760
        %2821 = vmatprep.subr.mxu0 %v2820
        %v2822 = vand.u32 %v263, 4294901760
        %2823 = vmatpush1.msra.mxu0 %v2822
        %v2824 = vand.u32 %v268, 4294901760
        %2825 = vmatprep.subr.mxu0 %v2824
        %v2826 = vand.u32 %v267, 4294901760
        %2827 = vmatpush1.msra.mxu0 %v2826
        %v2828 = vand.u32 %v272, 4294901760
        %2829 = vmatprep.subr.mxu0 %v2828
        %v2830 = vand.u32 %v271, 4294901760
        %2831 = vmatpush1.msra.mxu0 %v2830
        %v2832 = vand.u32 %v276, 4294901760
        %2833 = vmatprep.subr.mxu0 %v2832
        %v2834 = vand.u32 %v275, 4294901760
        %2835 = vmatpush1.msra.mxu0 %v2834
        %v2836 = vand.u32 %v280, 4294901760
        %2837 = vmatprep.subr.mxu0 %v2836
        %v2838 = vand.u32 %v279, 4294901760
        %2839 = vmatpush1.msra.mxu0 %v2838
        %v2840 = vand.u32 %v284, 4294901760
        %2841 = vmatprep.subr.mxu0 %v2840
        %v2842 = vand.u32 %v283, 4294901760
        %2843 = vmatpush1.msra.mxu0 %v2842
        %v2844 = vand.u32 %v288, 4294901760
        %2845 = vmatprep.subr.mxu0 %v2844
        %v2846 = vand.u32 %v287, 4294901760
        %2847 = vmatpush1.msra.mxu0 %v2846
        %v2848 = vand.u32 %v292, 4294901760
        %2849 = vmatprep.subr.mxu0 %v2848
        %v2850 = vand.u32 %v291, 4294901760
        %2851 = vmatpush1.msra.mxu0 %v2850
        %v2852 = vand.u32 %v296, 4294901760
        %2853 = vmatprep.subr.mxu0 %v2852
        %v2854 = vand.u32 %v295, 4294901760
        %2855 = vmatpush1.msra.mxu0 %v2854
        %v2856 = vand.u32 %v300, 4294901760
        %2857 = vmatprep.subr.mxu0 %v2856
        %v2858 = vand.u32 %v299, 4294901760
        %2859 = vmatpush1.msra.mxu0 %v2858
        %v2860 = vand.u32 %v304, 4294901760
        %2861 = vmatprep.subr.mxu0 %v2860
        %v2862 = vand.u32 %v303, 4294901760
        %2863 = vmatpush1.msra.mxu0 %v2862
        %v2864 = vand.u32 %v308, 4294901760
        %2865 = vmatprep.subr.mxu0 %v2864
        %v2866 = vand.u32 %v307, 4294901760
        %2867 = vmatpush1.msra.mxu0 %v2866
        %v2868 = vand.u32 %v312, 4294901760
        %2869 = vmatprep.subr.mxu0 %v2868
        %v2870 = vand.u32 %v311, 4294901760
        %2871 = vmatpush1.msra.mxu0 %v2870
        %v2872 = vand.u32 %v316, 4294901760
        %2873 = vmatprep.subr.mxu0 %v2872
        %v2874 = vand.u32 %v315, 4294901760
        %2875 = vmatpush1.msra.mxu0 %v2874
        %v2876 = vand.u32 %v320, 4294901760
        %2877 = vmatprep.subr.mxu0 %v2876
        %v2878 = vand.u32 %v319, 4294901760
        %2879 = vmatpush1.msra.mxu0 %v2878
        %v2880 = vand.u32 %v324, 4294901760
        %2881 = vmatprep.subr.mxu0 %v2880
        %v2882 = vand.u32 %v323, 4294901760
        %2883 = vmatpush1.msra.mxu0 %v2882
        %v2884 = vand.u32 %v328, 4294901760
        %2885 = vmatprep.subr.mxu0 %v2884
        %v2886 = vand.u32 %v327, 4294901760
        %2887 = vmatpush1.msra.mxu0 %v2886
        %v2888 = vand.u32 %v200, 4294901760
        %2889 = vmatprep.mubr.f32.mxu0 %v2888
        %v2890 = vand.u32 %v199, 4294901760
        %2891 = vmatmul.mubr.f32.gmra.mrb[0].mxu0 %v2890
        %v2892 = vpop.f32.mrb[0].mxu0
        %v2893 = vadd.f32 %v2756, %v2892
        %v2894 = vpop.f32.mrb[0].mxu0
        %v2895 = vadd.f32 %v2758, %v2894
        %2896 = vdwg.mxu0
        %2897 = vst [vmem:[%s196] sm:$0xff] %v1609
        %2898 = vst [vmem:[%s196 + $0x8] sm:$0xff] %v1611
        %2899 = vst [vmem:[%s196 + $0x10] sm:$0xff] %v2893
        %2900 = vst [vmem:[%s196 + $0x18] sm:$0xff] %v2895
        %s2901 = sand.u32 %s94, 1
        %s2902 = scalar_lea.sflag [#allocation4], %s2901
        %s2903 = sand.u32 %s94, 1
        %s2904 = smul.addr %s2903, 32
        %s2905 = scalar_lea.vmem [#allocation7], %s2904
        // Predicated region
        $region37: #{tpu_custom_call.1} parent=27 // pred_check
          %p2906 = pneg %p104
        $region38: #{tpu_custom_call.1} parent=27 // pred_check_branch
          %2908 = sbr.rel (%p2906) target = $region40
        $region39: #{tpu_custom_call.1} parent=27 // pred_region
          %s2909 = smul.u32 4, %s25
          %s2911 = ssub.s32 512, 512
          %2912 = vsyncadd %s2902, %s2911
          %s2913 = smul.addr %s24, 8
          %s2914 = sadd.s32 %s2909, %s2913
          %s2915 = smul.addr %s2914, 128
          %s2916 = scalar_lea.hbm %s2, %s2915
          %s2918 = sshll.u32 %s2905, 4
          %s2919 = int_to_ptr.vmem [resolvable:$true] %s2918
          %2921 = dma.vmem_to_hbm [thread:$0]  %s2919, 512, %s2916, %s2902
        $region40: #{tpu_custom_call.1} parent=27 // pred_fallthru
          _
      $region28: #{tpu_custom_call.1} parent=5 // pred_fallthru
        _
      %p2922 = scmp.le.s32.totalorder 2, %s15
      // Predicated region
      $region41: #{tpu_custom_call.1} parent=5 // pred_check
        %p2923 = pneg %p2922
      $region42: #{tpu_custom_call.1} parent=5 // pred_check_branch
        %2925 = sbr.rel (%p2923) target = $region44
      $region43: #{tpu_custom_call.1} parent=5 // pred_region
        %s2926 = ssub.s32 %s15, 2
        // Predicated region
        $region45: #{tpu_custom_call.1} parent=43 // pred_check
          %p2927 = pneg %p110
        $region46: #{tpu_custom_call.1} parent=43 // pred_check_branch
          %2929 = sbr.rel (%p2927) target = $region48
        $region47: #{tpu_custom_call.1} parent=43 // pred_region
          %s2930 = sand.u32 %s95, 1
          %s2931 = scalar_lea.sflag [#allocation4], %s2930
          %s2932 = sand.u32 %s95, 1
          %s2933 = smul.addr %s2932, 32
          %s2934 = scalar_lea.vmem [#allocation7], %s2933
          %2935 = dma.done %s2931, 512
        $region48: #{tpu_custom_call.1} parent=43 // pred_fallthru
          _
      $region44: #{tpu_custom_call.1} parent=5 // pred_fallthru
        _
    $region6: #{tpu_custom_call.1} parent=1 // loop_footer
      %s19 = sadd.s32 1, %s15
    $region7: #{tpu_custom_call.1} parent=1 // loop_footer_branch
      %14 = sbr.rel target = $region3
    $region8: #{tpu_custom_call.1} parent=1 // loop_exit
      _
    %2936 = vsyncpa [#allocation3], 1
    %s2937 = scalar_lea.sflag [#allocation3], 1
    %2938 = vsyncpa %s2937, 1
    %2939 = vsyncpa [#allocation6], 1
    %s2940 = scalar_lea.sflag [#allocation6], 1
    %2941 = vsyncpa %s2940, 1
    %2942 = vsyncpa [#allocation4], 1
    %s2943 = scalar_lea.sflag [#allocation4], 1
    %2944 = vsyncpa %s2943, 1

</llo_original>
